<compile_context>
chip_gen: v7x
topology: tpu7x:2x2x1
jax: 0.10.0
libtpu: 0.0.40
codegen_flags: <defaults>
</compile_context>

<pallas_src>
import math

import jax
import jax.numpy as jnp
from jax.experimental import pallas as pl
from jax.experimental.pallas import tpu as pltpu

# --------------------------------------------------------------------------- config
B = 2                      # batch
EMBED_DIM = 32             # hparams.embed_dim
PROJ_DIM = 16              # hparams.projection_dim
FFN_DIM = 64               # transformer FFN hidden
N_NUM = 3                  # numerical tabular attrs
CAT_CARDS = (4, 6)         # categorical tabular attr cardinalities
N_CAT = len(CAT_CARDS)
N_TAB_TOKENS = N_NUM + N_CAT
TS_LEN = 64                # time-series ("imaging") length
PATCH = 8
N_IMG_TOKENS = TS_LEN // PATCH
LANE = 128                 # lane width: Q/K/V padding and lane-dense output slab

_VMEM = lambda: pl.BlockSpec(memory_space=pltpu.MemorySpace.VMEM)


# --------------------------------------------------------------------------- kernel
def _layernorm(x, g, b, eps=1e-5):
    mu = jnp.mean(x, axis=-1, keepdims=True)
    var = jnp.mean((x - mu) ** 2, axis=-1, keepdims=True)
    return (x - mu) * jax.lax.rsqrt(var + eps) * g + b


def fused_forward_kernel(pm_ref, wpat_ref, bpat_ref,
                         tok_ref, bias_ref, imgsel_ref, pool_ref,
                         wqkv_ref, wo_ref,
                         ln1g_ref, ln1b_ref, w1_ref, b1_ref, w2_ref, b2_ref,
                         ln2g_ref, ln2b_ref,
                         wp1_ref, bp1_ref, wp2_ref, bp2_ref,
                         o_ref):
    """Whole MultimodalSimCLR forward in one kernel.

    pm:      [B, PATCH]        per-sample patch mean (linearity folds mean before matmul)
    tok:     [B*N, E]          flattened tabular tokens
    bias:    [B*N, B*N]        block-diagonal additive attention mask (0 / -1e30)
    imgsel:  [2B, B]           places h_img into rows 0..B-1 of the projector input
    pool:    [2B, B*N]         rows B..2B-1 mean-pool tabular tokens per sample
    wqkv:    [E, 3*128]        Wq|Wk|Wv, each zero-padded to 128 lanes (tile-aligned slices)
    wo:      [128, E]          attention output proj, zero-padded rows
    wp2/bp2: [E, 128]/[1,128]  projector output weights zero-padded -> lane-dense store
    o:       [2B, 128]         rows 0..B-1 = z_imaging, rows B..2B-1 = z_tabular (cols < PROJ_DIM)
    """
    E = EMBED_DIM

    # ---- imaging branch: single [B, PATCH] x [PATCH, E] matmul (mean taken before, exact) ----
    h_img = jnp.dot(pm_ref[...], wpat_ref[...],
                    preferred_element_type=jnp.float32) + bpat_ref[...]              # [B, E]

    # ---- tabular branch: single-head post-LN transformer block on flattened tokens ----
    x = tok_ref[...]                                                                 # [B*N, E]
    qkv = jnp.dot(x, wqkv_ref[...], preferred_element_type=jnp.float32)              # [B*N, 3*128]
    q = qkv[:, 0 * LANE:1 * LANE]                                                    # [B*N, 128]
    k = qkv[:, 1 * LANE:2 * LANE]
    v = qkv[:, 2 * LANE:3 * LANE]

    # block-diagonal attention across the flattened batch (mask kills cross-sample scores)
    s = jax.lax.dot_general(q, k, (((1,), (1,)), ((), ())),
                            preferred_element_type=jnp.float32)                      # [B*N, B*N]
    s = s * (1.0 / math.sqrt(E)) + bias_ref[...]
    s = s - jnp.max(s, axis=-1, keepdims=True)
    p = jnp.exp(s)
    p = p * pl.reciprocal(jnp.sum(p, axis=-1, keepdims=True), approx=True)
    ctx = jnp.dot(p, v, preferred_element_type=jnp.float32)                          # [B*N, 128]
    a = jnp.dot(ctx, wo_ref[...], preferred_element_type=jnp.float32)                # [B*N, E]
    x = _layernorm(x + a, ln1g_ref[...], ln1b_ref[...])

    # feed-forward
    h = jnp.dot(x, w1_ref[...], preferred_element_type=jnp.float32) + b1_ref[...]
    h = jnp.maximum(h, 0.0)
    x = _layernorm(
        x + jnp.dot(h, w2_ref[...], preferred_element_type=jnp.float32) + b2_ref[...],
        ln2g_ref[...], ln2b_ref[...])

    # ---- gather both modality reps into one [2B, E] matrix via tiny selector matmuls ----
    # rows 0..B-1 <- h_img ; rows B..2B-1 <- mean-pooled tabular tokens
    hcat = (jnp.dot(imgsel_ref[...], h_img, preferred_element_type=jnp.float32)
            + jnp.dot(pool_ref[...], x, preferred_element_type=jnp.float32))         # [2B, E]

    # ---- shared SimCLR projection head applied once to both modalities ----
    z = jnp.dot(hcat, wp1_ref[...], preferred_element_type=jnp.float32) + bp1_ref[...]
    z = jnp.maximum(z, 0.0)
    # wp2/bp2 zero-padded to 128 lanes -> full-width lane-dense store
    o_ref[...] = jnp.dot(z, wp2_ref[...], preferred_element_type=jnp.float32) + bp2_ref[...]


# --------------------------------------------------------------------------- params
def init_params(key):
    ks = iter(jax.random.split(key, 32))
    w = lambda shape, scale=0.02: scale * jax.random.normal(next(ks), shape, jnp.float32)
    params = {
        # time-series tokenizer (patch linear embedding)
        "w_patch": w((PATCH, EMBED_DIM)),
        "b_patch": jnp.zeros((EMBED_DIM,), jnp.float32),
        # tabular tokenizer (FT-Transformer style feature tokenizer)
        "w_num": w((N_NUM, EMBED_DIM)),
        "b_num": w((N_NUM, EMBED_DIM)),
        "emb_cat0": w((CAT_CARDS[0], EMBED_DIM)),
        "emb_cat1": w((CAT_CARDS[1], EMBED_DIM)),
        "b_cat": w((N_CAT, EMBED_DIM)),
        # tabular transformer encoder block
        "tab_encoder": {
            "wq": w((EMBED_DIM, EMBED_DIM)), "wk": w((EMBED_DIM, EMBED_DIM)),
            "wv": w((EMBED_DIM, EMBED_DIM)), "wo": w((EMBED_DIM, EMBED_DIM)),
            "ln1_g": jnp.ones((1, EMBED_DIM), jnp.float32),
            "ln1_b": jnp.zeros((1, EMBED_DIM), jnp.float32),
            "w1": w((EMBED_DIM, FFN_DIM)), "b1": jnp.zeros((1, FFN_DIM), jnp.float32),
            "w2": w((FFN_DIM, EMBED_DIM)), "b2": jnp.zeros((1, EMBED_DIM), jnp.float32),
            "ln2_g": jnp.ones((1, EMBED_DIM), jnp.float32),
            "ln2_b": jnp.zeros((1, EMBED_DIM), jnp.float32),
        },
        # shared SimCLR projection head
        "projector": {
            "wp1": w((EMBED_DIM, EMBED_DIM)), "bp1": jnp.zeros((1, EMBED_DIM), jnp.float32),
            "wp2": w((EMBED_DIM, PROJ_DIM)), "bp2": jnp.zeros((1, PROJ_DIM), jnp.float32),
        },
    }
    return params


# --------------------------------------------------------------------------- forward
@jax.jit
def multimodal_simclr_forward(params, x_imaging, x_tabular):
    R = B * N_TAB_TOKENS
    enc = params["tab_encoder"]
    proj = params["projector"]

    # ----- imaging / time-series branch (linearity: mean over patches BEFORE the linear) -----
    # TODO(synk): __init__ declares no dedicated imaging encoder (only the time-series
    # tokenizer), so the imaging representation is the mean-pooled token embedding.
    patch_mean = x_imaging.reshape(B, N_IMG_TOKENS, PATCH).mean(axis=1)      # [B, PATCH]

    # ----- tabular tokenizer (glue: per-feature scaling + embedding gathers in plain JAX) -----
    x_num = x_tabular[:, :N_NUM]                                             # [B, N_NUM]
    x_cat = x_tabular[:, N_NUM:].astype(jnp.int32)                           # [B, N_CAT]
    tok_num = x_num[:, :, None] * params["w_num"][None] + params["b_num"][None]
    cat0 = jnp.take(params["emb_cat0"], x_cat[:, 0], axis=0)
    cat1 = jnp.take(params["emb_cat1"], x_cat[:, 1], axis=0)
    tok_cat = jnp.stack([cat0, cat1], axis=1) + params["b_cat"][None]
    tok_tab = jnp.concatenate([tok_num, tok_cat], axis=1)                    # [B, N_tab, E]
    tok_tab = tok_tab.reshape(R, EMBED_DIM)                                  # flattened 2-D

    # ----- static-shape constants (block-diag attention mask, pooling / selector matrices) -----
    sid = jnp.arange(R) // N_TAB_TOKENS                                      # sample id per token
    attn_bias = jnp.where(sid[:, None] == sid[None, :], 0.0, -1e30).astype(jnp.float32)  # [R, R]
    pool = (jnp.arange(B)[:, None] == sid[None, :]).astype(jnp.float32) / N_TAB_TOKENS   # [B, R]
    pool_big = jnp.concatenate([jnp.zeros((B, R), jnp.float32), pool], axis=0)           # [2B, R]
    img_sel = jnp.concatenate([jnp.eye(B, dtype=jnp.float32),
                               jnp.zeros((B, B), jnp.float32)], axis=0)                  # [2B, B]

    # ----- weight packing / lane padding (so in-kernel slices & store are tile-aligned) -----
    pad_lanes = LANE - EMBED_DIM
    w_qkv = jnp.concatenate(
        [jnp.pad(enc["wq"], ((0, 0), (0, pad_lanes))),
         jnp.pad(enc["wk"], ((0, 0), (0, pad_lanes))),
         jnp.pad(enc["wv"], ((0, 0), (0, pad_lanes)))], axis=1)              # [E, 3*128]
    wo_pad = jnp.pad(enc["wo"], ((0, pad_lanes), (0, 0)))                    # [128, E]
    wp2_pad = jnp.pad(proj["wp2"], ((0, 0), (0, LANE - PROJ_DIM)))           # [E, 128]
    bp2_pad = jnp.pad(proj["bp2"], ((0, 0), (0, LANE - PROJ_DIM)))           # [1, 128]

    # ----- single fused Pallas call: whole model fits comfortably in VMEM -----
    out = pl.pallas_call(
        fused_forward_kernel,
        out_shape=jax.ShapeDtypeStruct((2 * B, LANE), jnp.float32),
        in_specs=[_VMEM()] * 21,
        out_specs=_VMEM(),
    )(patch_mean,
      params["w_patch"], params["b_patch"].reshape(1, EMBED_DIM),
      tok_tab, attn_bias, img_sel, pool_big,
      w_qkv, wo_pad,
      enc["ln1_g"], enc["ln1_b"], enc["w1"], enc["b1"], enc["w2"], enc["b2"],
      enc["ln2_g"], enc["ln2_b"],
      proj["wp1"], proj["bp1"], wp2_pad, bp2_pad)

    z_imaging = out[:B, :PROJ_DIM]
    z_tabular = out[B:, :PROJ_DIM]
    return z_imaging, z_tabular


# --------------------------------------------------------------------------- main
if __name__ == "__main__":
    root = jax.random.PRNGKey(0)
    k_params, k_img, k_num, k_cat = jax.random.split(root, 4)

    params = init_params(k_params)

    x_imaging = jax.random.normal(k_img, (B, TS_LEN), dtype=jnp.float32)
    x_num = jax.random.normal(k_num, (B, N_NUM), dtype=jnp.float32)
    cat_keys = jax.random.split(k_cat, N_CAT)
    x_cat = jnp.stack(
        [jax.random.randint(k, (B,), 0, c) for k, c in zip(cat_keys, CAT_CARDS)], axis=1
    ).astype(jnp.float32)
    x_tabular = jnp.concatenate([x_num, x_cat], axis=1)                      # [B, N_NUM + N_CAT]

    z_img, z_tab = multimodal_simclr_forward(params, x_imaging, x_tabular)
    jax.block_until_ready((z_img, z_tab))

    assert z_img.shape == (B, PROJ_DIM) and z_tab.shape == (B, PROJ_DIM)
    assert z_img.dtype == jnp.float32 and z_tab.dtype == jnp.float32
    assert bool(jnp.all(jnp.isfinite(z_img))) and bool(jnp.all(jnp.isfinite(z_tab)))
    print("KERNEL_OK")
</pallas_src>

<mosaic_0001>
module attributes {stable_mosaic.version = 11 : i64} {
  func.func @fused_forward_kernel(%arg0: memref<2x8xf32, #tpu.memory_space<vmem>>, %arg1: memref<8x32xf32, #tpu.memory_space<vmem>>, %arg2: memref<1x32xf32, #tpu.memory_space<vmem>>, %arg3: memref<10x32xf32, #tpu.memory_space<vmem>>, %arg4: memref<10x10xf32, #tpu.memory_space<vmem>>, %arg5: memref<4x2xf32, #tpu.memory_space<vmem>>, %arg6: memref<4x10xf32, #tpu.memory_space<vmem>>, %arg7: memref<32x384xf32, #tpu.memory_space<vmem>>, %arg8: memref<128x32xf32, #tpu.memory_space<vmem>>, %arg9: memref<1x32xf32, #tpu.memory_space<vmem>>, %arg10: memref<1x32xf32, #tpu.memory_space<vmem>>, %arg11: memref<32x64xf32, #tpu.memory_space<vmem>>, %arg12: memref<1x64xf32, #tpu.memory_space<vmem>>, %arg13: memref<64x32xf32, #tpu.memory_space<vmem>>, %arg14: memref<1x32xf32, #tpu.memory_space<vmem>>, %arg15: memref<1x32xf32, #tpu.memory_space<vmem>>, %arg16: memref<1x32xf32, #tpu.memory_space<vmem>>, %arg17: memref<32x32xf32, #tpu.memory_space<vmem>>, %arg18: memref<1x32xf32, #tpu.memory_space<vmem>>, %arg19: memref<32x128xf32, #tpu.memory_space<vmem>>, %arg20: memref<1x128xf32, #tpu.memory_space<vmem>>, %arg21: memref<4x128xf32, #tpu.memory_space<vmem>>) attributes {dimension_semantics = [], scalar_prefetch = 0 : i64, scratch_operands = 0 : i64, tpu.core_type = #tpu.core_type<tc>} {
    %c0 = arith.constant 0 : index
    %c0_0 = arith.constant 0 : index
    %0 = vector.load %arg0[%c0, %c0_0] : memref<2x8xf32, #tpu.memory_space<vmem>>, vector<2x8xf32>
    %c0_1 = arith.constant 0 : index
    %c0_2 = arith.constant 0 : index
    %1 = vector.load %arg1[%c0_1, %c0_2] : memref<8x32xf32, #tpu.memory_space<vmem>>, vector<8x32xf32>
    %cst = arith.constant dense<0.000000e+00> : vector<2x32xf32>
    %2 = tpu.matmul %0, %1, %cst {dimension_numbers = #tpu.dot_dimension_numbers<[1], [0], [0], [1], [0, 0, 1, 1], [], []>} : vector<2x8xf32>, vector<8x32xf32>, vector<2x32xf32> -> vector<2x32xf32>
    %c0_3 = arith.constant 0 : index
    %c0_4 = arith.constant 0 : index
    %3 = vector.load %arg2[%c0_3, %c0_4] : memref<1x32xf32, #tpu.memory_space<vmem>>, vector<1x32xf32>
    %4 = vector.broadcast %3 : vector<1x32xf32> to vector<2x32xf32>
    %5 = arith.addf %2, %4 : vector<2x32xf32>
    %c0_5 = arith.constant 0 : index
    %c0_6 = arith.constant 0 : index
    %6 = vector.load %arg3[%c0_5, %c0_6] : memref<10x32xf32, #tpu.memory_space<vmem>>, vector<10x32xf32>
    %c0_7 = arith.constant 0 : index
    %c0_8 = arith.constant 0 : index
    %7 = vector.load %arg7[%c0_7, %c0_8] : memref<32x384xf32, #tpu.memory_space<vmem>>, vector<32x384xf32>
    %cst_9 = arith.constant dense<0.000000e+00> : vector<10x384xf32>
    %8 = tpu.matmul %6, %7, %cst_9 {dimension_numbers = #tpu.dot_dimension_numbers<[1], [0], [0], [1], [0, 0, 1, 1], [], []>} : vector<10x32xf32>, vector<32x384xf32>, vector<10x384xf32> -> vector<10x384xf32>
    %9 = vector.extract_strided_slice %8 {offsets = [0, 0], sizes = [10, 128], strides = [1, 1]} : vector<10x384xf32> to vector<10x128xf32>
    %10 = vector.extract_strided_slice %8 {offsets = [0, 128], sizes = [10, 128], strides = [1, 1]} : vector<10x384xf32> to vector<10x128xf32>
    %11 = vector.extract_strided_slice %8 {offsets = [0, 256], sizes = [10, 128], strides = [1, 1]} : vector<10x384xf32> to vector<10x128xf32>
    %cst_10 = arith.constant dense<0.000000e+00> : vector<10x10xf32>
    %12 = tpu.matmul %9, %10, %cst_10 {dimension_numbers = #tpu.dot_dimension_numbers<[1], [1], [0], [0], [0, 0, 1, 0], [], []>} : vector<10x128xf32>, vector<10x128xf32>, vector<10x10xf32> -> vector<10x10xf32>
    %cst_11 = arith.constant 0.176776692 : f32
    %13 = vector.broadcast %cst_11 : f32 to vector<10x10xf32>
    %14 = arith.mulf %12, %13 : vector<10x10xf32>
    %c0_12 = arith.constant 0 : index
    %c0_13 = arith.constant 0 : index
    %15 = vector.load %arg4[%c0_12, %c0_13] : memref<10x10xf32, #tpu.memory_space<vmem>>, vector<10x10xf32>
    %16 = arith.addf %14, %15 : vector<10x10xf32>
    %cst_14 = arith.constant dense<0xFF800000> : vector<10xf32>
    %17 = vector.multi_reduction <maximumf>, %16, %cst_14 [1] : vector<10x10xf32> to vector<10xf32>
    %18 = vector.shape_cast %17 : vector<10xf32> to vector<10x1xf32>
    %19 = vector.broadcast %18 : vector<10x1xf32> to vector<10x10xf32>
    %20 = arith.subf %16, %19 : vector<10x10xf32>
    %21 = math.exp %20 : vector<10x10xf32>
    %cst_15 = arith.constant dense<0.000000e+00> : vector<10xf32>
    %22 = vector.multi_reduction <add>, %21, %cst_15 [1] : vector<10x10xf32> to vector<10xf32>
    %23 = vector.shape_cast %22 : vector<10xf32> to vector<10x1xf32>
    %24 = tpu.reciprocal %23 {approx = true} : vector<10x1xf32> -> vector<10x1xf32>
    %25 = vector.broadcast %24 : vector<10x1xf32> to vector<10x10xf32>
    %26 = arith.mulf %21, %25 : vector<10x10xf32>
    %cst_16 = arith.constant dense<0.000000e+00> : vector<10x128xf32>
    %27 = tpu.matmul %26, %11, %cst_16 {dimension_numbers = #tpu.dot_dimension_numbers<[1], [0], [0], [1], [0, 0, 1, 1], [], []>} : vector<10x10xf32>, vector<10x128xf32>, vector<10x128xf32> -> vector<10x128xf32>
    %c0_17 = arith.constant 0 : index
    %c0_18 = arith.constant 0 : index
    %28 = vector.load %arg8[%c0_17, %c0_18] : memref<128x32xf32, #tpu.memory_space<vmem>>, vector<128x32xf32>
    %cst_19 = arith.constant dense<0.000000e+00> : vector<10x32xf32>
    %29 = tpu.matmul %27, %28, %cst_19 {dimension_numbers = #tpu.dot_dimension_numbers<[1], [0], [0], [1], [0, 0, 1, 1], [], []>} : vector<10x128xf32>, vector<128x32xf32>, vector<10x32xf32> -> vector<10x32xf32>
    %30 = arith.addf %6, %29 : vector<10x32xf32>
    %c0_20 = arith.constant 0 : index
    %c0_21 = arith.constant 0 : index
    %31 = vector.load %arg9[%c0_20, %c0_21] : memref<1x32xf32, #tpu.memory_space<vmem>>, vector<1x32xf32>
    %c0_22 = arith.constant 0 : index
    %c0_23 = arith.constant 0 : index
    %32 = vector.load %arg10[%c0_22, %c0_23] : memref<1x32xf32, #tpu.memory_space<vmem>>, vector<1x32xf32>
    %cst_24 = arith.constant dense<0.000000e+00> : vector<10xf32>
    %33 = vector.multi_reduction <add>, %30, %cst_24 [1] : vector<10x32xf32> to vector<10xf32>
    %34 = vector.shape_cast %33 : vector<10xf32> to vector<10x1xf32>
    %cst_25 = arith.constant 3.200000e+01 : f32
    %35 = vector.broadcast %cst_25 : f32 to vector<10x1xf32>
    %36 = arith.divf %34, %35 : vector<10x1xf32>
    %37 = vector.broadcast %36 : vector<10x1xf32> to vector<10x32xf32>
    %38 = arith.subf %30, %37 : vector<10x32xf32>
    %39 = arith.mulf %38, %38 : vector<10x32xf32>
    %cst_26 = arith.constant dense<0.000000e+00> : vector<10xf32>
    %40 = vector.multi_reduction <add>, %39, %cst_26 [1] : vector<10x32xf32> to vector<10xf32>
    %41 = vector.shape_cast %40 : vector<10xf32> to vector<10x1xf32>
    %cst_27 = arith.constant 3.200000e+01 : f32
    %42 = vector.broadcast %cst_27 : f32 to vector<10x1xf32>
    %43 = arith.divf %41, %42 : vector<10x1xf32>
    %44 = vector.broadcast %36 : vector<10x1xf32> to vector<10x32xf32>
    %45 = arith.subf %30, %44 : vector<10x32xf32>
    %cst_28 = arith.constant 9.99999974E-6 : f32
    %46 = vector.broadcast %cst_28 : f32 to vector<10x1xf32>
    %47 = arith.addf %43, %46 : vector<10x1xf32>
    %48 = math.rsqrt %47 : vector<10x1xf32>
    %49 = vector.broadcast %48 : vector<10x1xf32> to vector<10x32xf32>
    %50 = arith.mulf %45, %49 : vector<10x32xf32>
    %51 = vector.broadcast %31 : vector<1x32xf32> to vector<10x32xf32>
    %52 = arith.mulf %50, %51 : vector<10x32xf32>
    %53 = vector.broadcast %32 : vector<1x32xf32> to vector<10x32xf32>
    %54 = arith.addf %52, %53 : vector<10x32xf32>
    %c0_29 = arith.constant 0 : index
    %c0_30 = arith.constant 0 : index
    %55 = vector.load %arg11[%c0_29, %c0_30] : memref<32x64xf32, #tpu.memory_space<vmem>>, vector<32x64xf32>
    %cst_31 = arith.constant dense<0.000000e+00> : vector<10x64xf32>
    %56 = tpu.matmul %54, %55, %cst_31 {dimension_numbers = #tpu.dot_dimension_numbers<[1], [0], [0], [1], [0, 0, 1, 1], [], []>} : vector<10x32xf32>, vector<32x64xf32>, vector<10x64xf32> -> vector<10x64xf32>
    %c0_32 = arith.constant 0 : index
    %c0_33 = arith.constant 0 : index
    %57 = vector.load %arg12[%c0_32, %c0_33] : memref<1x64xf32, #tpu.memory_space<vmem>>, vector<1x64xf32>
    %58 = vector.broadcast %57 : vector<1x64xf32> to vector<10x64xf32>
    %59 = arith.addf %56, %58 : vector<10x64xf32>
    %cst_34 = arith.constant 0.000000e+00 : f32
    %60 = vector.broadcast %cst_34 : f32 to vector<10x64xf32>
    %61 = arith.maximumf %59, %60 : vector<10x64xf32>
    %c0_35 = arith.constant 0 : index
    %c0_36 = arith.constant 0 : index
    %62 = vector.load %arg13[%c0_35, %c0_36] : memref<64x32xf32, #tpu.memory_space<vmem>>, vector<64x32xf32>
    %cst_37 = arith.constant dense<0.000000e+00> : vector<10x32xf32>
    %63 = tpu.matmul %61, %62, %cst_37 {dimension_numbers = #tpu.dot_dimension_numbers<[1], [0], [0], [1], [0, 0, 1, 1], [], []>} : vector<10x64xf32>, vector<64x32xf32>, vector<10x32xf32> -> vector<10x32xf32>
    %64 = arith.addf %54, %63 : vector<10x32xf32>
    %c0_38 = arith.constant 0 : index
    %c0_39 = arith.constant 0 : index
    %65 = vector.load %arg14[%c0_38, %c0_39] : memref<1x32xf32, #tpu.memory_space<vmem>>, vector<1x32xf32>
    %66 = vector.broadcast %65 : vector<1x32xf32> to vector<10x32xf32>
    %67 = arith.addf %64, %66 : vector<10x32xf32>
    %c0_40 = arith.constant 0 : index
    %c0_41 = arith.constant 0 : index
    %68 = vector.load %arg15[%c0_40, %c0_41] : memref<1x32xf32, #tpu.memory_space<vmem>>, vector<1x32xf32>
    %c0_42 = arith.constant 0 : index
    %c0_43 = arith.constant 0 : index
    %69 = vector.load %arg16[%c0_42, %c0_43] : memref<1x32xf32, #tpu.memory_space<vmem>>, vector<1x32xf32>
    %cst_44 = arith.constant dense<0.000000e+00> : vector<10xf32>
    %70 = vector.multi_reduction <add>, %67, %cst_44 [1] : vector<10x32xf32> to vector<10xf32>
    %71 = vector.shape_cast %70 : vector<10xf32> to vector<10x1xf32>
    %cst_45 = arith.constant 3.200000e+01 : f32
    %72 = vector.broadcast %cst_45 : f32 to vector<10x1xf32>
    %73 = arith.divf %71, %72 : vector<10x1xf32>
    %74 = vector.broadcast %73 : vector<10x1xf32> to vector<10x32xf32>
    %75 = arith.subf %67, %74 : vector<10x32xf32>
    %76 = arith.mulf %75, %75 : vector<10x32xf32>
    %cst_46 = arith.constant dense<0.000000e+00> : vector<10xf32>
    %77 = vector.multi_reduction <add>, %76, %cst_46 [1] : vector<10x32xf32> to vector<10xf32>
    %78 = vector.shape_cast %77 : vector<10xf32> to vector<10x1xf32>
    %cst_47 = arith.constant 3.200000e+01 : f32
    %79 = vector.broadcast %cst_47 : f32 to vector<10x1xf32>
    %80 = arith.divf %78, %79 : vector<10x1xf32>
    %81 = vector.broadcast %73 : vector<10x1xf32> to vector<10x32xf32>
    %82 = arith.subf %67, %81 : vector<10x32xf32>
    %cst_48 = arith.constant 9.99999974E-6 : f32
    %83 = vector.broadcast %cst_48 : f32 to vector<10x1xf32>
    %84 = arith.addf %80, %83 : vector<10x1xf32>
    %85 = math.rsqrt %84 : vector<10x1xf32>
    %86 = vector.broadcast %85 : vector<10x1xf32> to vector<10x32xf32>
    %87 = arith.mulf %82, %86 : vector<10x32xf32>
    %88 = vector.broadcast %68 : vector<1x32xf32> to vector<10x32xf32>
    %89 = arith.mulf %87, %88 : vector<10x32xf32>
    %90 = vector.broadcast %69 : vector<1x32xf32> to vector<10x32xf32>
    %91 = arith.addf %89, %90 : vector<10x32xf32>
    %c0_49 = arith.constant 0 : index
    %c0_50 = arith.constant 0 : index
    %92 = vector.load %arg5[%c0_49, %c0_50] : memref<4x2xf32, #tpu.memory_space<vmem>>, vector<4x2xf32>
    %cst_51 = arith.constant dense<0.000000e+00> : vector<4x32xf32>
    %93 = tpu.matmul %92, %5, %cst_51 {dimension_numbers = #tpu.dot_dimension_numbers<[1], [0], [0], [1], [0, 0, 1, 1], [], []>} : vector<4x2xf32>, vector<2x32xf32>, vector<4x32xf32> -> vector<4x32xf32>
    %c0_52 = arith.constant 0 : index
    %c0_53 = arith.constant 0 : index
    %94 = vector.load %arg6[%c0_52, %c0_53] : memref<4x10xf32, #tpu.memory_space<vmem>>, vector<4x10xf32>
    %cst_54 = arith.constant dense<0.000000e+00> : vector<4x32xf32>
    %95 = tpu.matmul %94, %91, %cst_54 {dimension_numbers = #tpu.dot_dimension_numbers<[1], [0], [0], [1], [0, 0, 1, 1], [], []>} : vector<4x10xf32>, vector<10x32xf32>, vector<4x32xf32> -> vector<4x32xf32>
    %96 = arith.addf %93, %95 : vector<4x32xf32>
    %c0_55 = arith.constant 0 : index
    %c0_56 = arith.constant 0 : index
    %97 = vector.load %arg17[%c0_55, %c0_56] : memref<32x32xf32, #tpu.memory_space<vmem>>, vector<32x32xf32>
    %cst_57 = arith.constant dense<0.000000e+00> : vector<4x32xf32>
    %98 = tpu.matmul %96, %97, %cst_57 {dimension_numbers = #tpu.dot_dimension_numbers<[1], [0], [0], [1], [0, 0, 1, 1], [], []>} : vector<4x32xf32>, vector<32x32xf32>, vector<4x32xf32> -> vector<4x32xf32>
    %c0_58 = arith.constant 0 : index
    %c0_59 = arith.constant 0 : index
    %99 = vector.load %arg18[%c0_58, %c0_59] : memref<1x32xf32, #tpu.memory_space<vmem>>, vector<1x32xf32>
    %100 = vector.broadcast %99 : vector<1x32xf32> to vector<4x32xf32>
    %101 = arith.addf %98, %100 : vector<4x32xf32>
    %cst_60 = arith.constant 0.000000e+00 : f32
    %102 = vector.broadcast %cst_60 : f32 to vector<4x32xf32>
    %103 = arith.maximumf %101, %102 : vector<4x32xf32>
    %c0_61 = arith.constant 0 : index
    %c0_62 = arith.constant 0 : index
    %104 = vector.load %arg19[%c0_61, %c0_62] : memref<32x128xf32, #tpu.memory_space<vmem>>, vector<32x128xf32>
    %cst_63 = arith.constant dense<0.000000e+00> : vector<4x128xf32>
    %105 = tpu.matmul %103, %104, %cst_63 {dimension_numbers = #tpu.dot_dimension_numbers<[1], [0], [0], [1], [0, 0, 1, 1], [], []>} : vector<4x32xf32>, vector<32x128xf32>, vector<4x128xf32> -> vector<4x128xf32>
    %c0_64 = arith.constant 0 : index
    %c0_65 = arith.constant 0 : index
    %106 = vector.load %arg20[%c0_64, %c0_65] : memref<1x128xf32, #tpu.memory_space<vmem>>, vector<1x128xf32>
    %107 = vector.broadcast %106 : vector<1x128xf32> to vector<4x128xf32>
    %108 = arith.addf %105, %107 : vector<4x128xf32>
    %c0_66 = arith.constant 0 : index
    %c0_67 = arith.constant 0 : index
    %109 = vector.load %arg21[%c0_66, %c0_67] : memref<4x128xf32, #tpu.memory_space<vmem>>, vector<4x128xf32>
    tpu.vector_store %arg21[%c0_66, %c0_67], %108 {strides = array<i32>} : memref<4x128xf32, #tpu.memory_space<vmem>>, vector<4x128xf32>,
    return
  }
}

</mosaic_0001>

<llo_original>
// kernel: multimodal_simclr_forward.1
$region0: #{multimodal_simclr_forward.1}
  #allocation0 [shape = 'u32[]', space=smem, size = 0x4, offset = 0x4, fixed_abs, tag = 'smem constant byte address 0x4 - core index']
  #allocation1 [shape = 'u32[144,128]{1,0:T(1,128)}', space=vmem, size = 0x12000, scoped, tag = 'internal scratch']
  %s0 = inlined_call_operand.vmem [shape: f32[2,8], index: 0, kind: input, shape index: {}]
  %s1 = inlined_call_operand.vmem [shape: f32[8,32], index: 1, kind: input, shape index: {}]
  %s2 = inlined_call_operand.vmem [shape: f32[1,32], index: 2, kind: input, shape index: {}]
  %s3 = inlined_call_operand.vmem [shape: f32[10,32], index: 3, kind: input, shape index: {}]
  %s4 = inlined_call_operand.vmem [shape: f32[10,10], index: 4, kind: input, shape index: {}]
  %s5 = inlined_call_operand.vmem [shape: f32[4,2], index: 5, kind: input, shape index: {}]
  %s6 = inlined_call_operand.vmem [shape: f32[4,10], index: 6, kind: input, shape index: {}]
  %s7 = inlined_call_operand.vmem [shape: f32[32,384], index: 7, kind: input, shape index: {}]
  %s8 = inlined_call_operand.vmem [shape: f32[128,32], index: 8, kind: input, shape index: {}]
  %s9 = inlined_call_operand.vmem [shape: f32[1,32], index: 9, kind: input, shape index: {}]
  %s10 = inlined_call_operand.vmem [shape: f32[1,32], index: 10, kind: input, shape index: {}]
  %s11 = inlined_call_operand.vmem [shape: f32[32,64], index: 11, kind: input, shape index: {}]
  %s12 = inlined_call_operand.vmem [shape: f32[1,64], index: 12, kind: input, shape index: {}]
  %s13 = inlined_call_operand.vmem [shape: f32[64,32], index: 13, kind: input, shape index: {}]
  %s14 = inlined_call_operand.vmem [shape: f32[1,32], index: 14, kind: input, shape index: {}]
  %s15 = inlined_call_operand.vmem [shape: f32[1,32], index: 15, kind: input, shape index: {}]
  %s16 = inlined_call_operand.vmem [shape: f32[1,32], index: 16, kind: input, shape index: {}]
  %s17 = inlined_call_operand.vmem [shape: f32[32,32], index: 17, kind: input, shape index: {}]
  %s18 = inlined_call_operand.vmem [shape: f32[1,32], index: 18, kind: input, shape index: {}]
  %s19 = inlined_call_operand.vmem [shape: f32[32,128], index: 19, kind: input, shape index: {}]
  %s20 = inlined_call_operand.vmem [shape: f32[1,128], index: 20, kind: input, shape index: {}]
  %s21 = inlined_call_operand.vmem [shape: f32[4,128], index: 21, kind: output, shape index: {}]
  %s22 = sld [smem:[#allocation0]]
  $region94: #{multimodal_simclr_forward.1} parent=0
    _
  %s24 = ssub.s32 1, %s22
  %s25 = scalar_select 0, %s24, %s22
  // Predicated region
  $region2: #{multimodal_simclr_forward.1} parent=0 // pred_check
    _
  $region3: #{multimodal_simclr_forward.1} parent=0 // pred_check_branch
    %27 = sbr.rel (0) target = $region5
  $region4: #{multimodal_simclr_forward.1} parent=0 // pred_region
    _
  $region5: #{multimodal_simclr_forward.1} parent=0 // pred_fallthru
    _
  // Predicated region
  $region6: #{multimodal_simclr_forward.1} parent=0 // pred_check
    _
  $region7: #{multimodal_simclr_forward.1} parent=0 // pred_check_branch
    %29 = sbr.rel (0) target = $region9
  $region8: #{multimodal_simclr_forward.1} parent=0 // pred_region
    _
  $region9: #{multimodal_simclr_forward.1} parent=0 // pred_fallthru
    _
  // Predicated region
  $region10: #{multimodal_simclr_forward.1} parent=0 // pred_check
    _
  $region11: #{multimodal_simclr_forward.1} parent=0 // pred_check_branch
    %31 = sbr.rel (0) target = $region13
  $region12: #{multimodal_simclr_forward.1} parent=0 // pred_region
    _
  $region13: #{multimodal_simclr_forward.1} parent=0 // pred_fallthru
    _
  // Predicated region
  $region14: #{multimodal_simclr_forward.1} parent=0 // pred_check
    _
  $region15: #{multimodal_simclr_forward.1} parent=0 // pred_check_branch
    %33 = sbr.rel (0) target = $region17
  $region16: #{multimodal_simclr_forward.1} parent=0 // pred_region
    _
  $region17: #{multimodal_simclr_forward.1} parent=0 // pred_fallthru
    _
  // Predicated region
  $region18: #{multimodal_simclr_forward.1} parent=0 // pred_check
    _
  $region19: #{multimodal_simclr_forward.1} parent=0 // pred_check_branch
    %35 = sbr.rel (0) target = $region21
  $region20: #{multimodal_simclr_forward.1} parent=0 // pred_region
    _
  $region21: #{multimodal_simclr_forward.1} parent=0 // pred_fallthru
    _
  // Predicated region
  $region22: #{multimodal_simclr_forward.1} parent=0 // pred_check
    _
  $region23: #{multimodal_simclr_forward.1} parent=0 // pred_check_branch
    %37 = sbr.rel (0) target = $region25
  $region24: #{multimodal_simclr_forward.1} parent=0 // pred_region
    _
  $region25: #{multimodal_simclr_forward.1} parent=0 // pred_fallthru
    _
  // Predicated region
  $region26: #{multimodal_simclr_forward.1} parent=0 // pred_check
    _
  $region27: #{multimodal_simclr_forward.1} parent=0 // pred_check_branch
    %39 = sbr.rel (0) target = $region29
  $region28: #{multimodal_simclr_forward.1} parent=0 // pred_region
    _
  $region29: #{multimodal_simclr_forward.1} parent=0 // pred_fallthru
    _
  // Predicated region
  $region30: #{multimodal_simclr_forward.1} parent=0 // pred_check
    _
  $region31: #{multimodal_simclr_forward.1} parent=0 // pred_check_branch
    %41 = sbr.rel (0) target = $region33
  $region32: #{multimodal_simclr_forward.1} parent=0 // pred_region
    _
  $region33: #{multimodal_simclr_forward.1} parent=0 // pred_fallthru
    _
  // Predicated region
  $region34: #{multimodal_simclr_forward.1} parent=0 // pred_check
    _
  $region35: #{multimodal_simclr_forward.1} parent=0 // pred_check_branch
    %43 = sbr.rel (0) target = $region37
  $region36: #{multimodal_simclr_forward.1} parent=0 // pred_region
    _
  $region37: #{multimodal_simclr_forward.1} parent=0 // pred_fallthru
    _
  // Predicated region
  $region38: #{multimodal_simclr_forward.1} parent=0 // pred_check
    _
  $region39: #{multimodal_simclr_forward.1} parent=0 // pred_check_branch
    %45 = sbr.rel (0) target = $region41
  $region40: #{multimodal_simclr_forward.1} parent=0 // pred_region
    _
  $region41: #{multimodal_simclr_forward.1} parent=0 // pred_fallthru
    _
  // Predicated region
  $region42: #{multimodal_simclr_forward.1} parent=0 // pred_check
    _
  $region43: #{multimodal_simclr_forward.1} parent=0 // pred_check_branch
    %47 = sbr.rel (0) target = $region45
  $region44: #{multimodal_simclr_forward.1} parent=0 // pred_region
    _
  $region45: #{multimodal_simclr_forward.1} parent=0 // pred_fallthru
    _
  // Predicated region
  $region46: #{multimodal_simclr_forward.1} parent=0 // pred_check
    _
  $region47: #{multimodal_simclr_forward.1} parent=0 // pred_check_branch
    %49 = sbr.rel (0) target = $region49
  $region48: #{multimodal_simclr_forward.1} parent=0 // pred_region
    _
  $region49: #{multimodal_simclr_forward.1} parent=0 // pred_fallthru
    _
  // Predicated region
  $region50: #{multimodal_simclr_forward.1} parent=0 // pred_check
    _
  $region51: #{multimodal_simclr_forward.1} parent=0 // pred_check_branch
    %51 = sbr.rel (0) target = $region53
  $region52: #{multimodal_simclr_forward.1} parent=0 // pred_region
    _
  $region53: #{multimodal_simclr_forward.1} parent=0 // pred_fallthru
    _
  // Predicated region
  $region54: #{multimodal_simclr_forward.1} parent=0 // pred_check
    _
  $region55: #{multimodal_simclr_forward.1} parent=0 // pred_check_branch
    %53 = sbr.rel (0) target = $region57
  $region56: #{multimodal_simclr_forward.1} parent=0 // pred_region
    _
  $region57: #{multimodal_simclr_forward.1} parent=0 // pred_fallthru
    _
  // Predicated region
  $region58: #{multimodal_simclr_forward.1} parent=0 // pred_check
    _
  $region59: #{multimodal_simclr_forward.1} parent=0 // pred_check_branch
    %55 = sbr.rel (0) target = $region61
  $region60: #{multimodal_simclr_forward.1} parent=0 // pred_region
    _
  $region61: #{multimodal_simclr_forward.1} parent=0 // pred_fallthru
    _
  // Predicated region
  $region62: #{multimodal_simclr_forward.1} parent=0 // pred_check
    _
  $region63: #{multimodal_simclr_forward.1} parent=0 // pred_check_branch
    %57 = sbr.rel (0) target = $region65
  $region64: #{multimodal_simclr_forward.1} parent=0 // pred_region
    _
  $region65: #{multimodal_simclr_forward.1} parent=0 // pred_fallthru
    _
  // Predicated region
  $region66: #{multimodal_simclr_forward.1} parent=0 // pred_check
    _
  $region67: #{multimodal_simclr_forward.1} parent=0 // pred_check_branch
    %59 = sbr.rel (0) target = $region69
  $region68: #{multimodal_simclr_forward.1} parent=0 // pred_region
    _
  $region69: #{multimodal_simclr_forward.1} parent=0 // pred_fallthru
    _
  // Predicated region
  $region70: #{multimodal_simclr_forward.1} parent=0 // pred_check
    _
  $region71: #{multimodal_simclr_forward.1} parent=0 // pred_check_branch
    %61 = sbr.rel (0) target = $region73
  $region72: #{multimodal_simclr_forward.1} parent=0 // pred_region
    _
  $region73: #{multimodal_simclr_forward.1} parent=0 // pred_fallthru
    _
  // Predicated region
  $region74: #{multimodal_simclr_forward.1} parent=0 // pred_check
    _
  $region75: #{multimodal_simclr_forward.1} parent=0 // pred_check_branch
    %63 = sbr.rel (0) target = $region77
  $region76: #{multimodal_simclr_forward.1} parent=0 // pred_region
    _
  $region77: #{multimodal_simclr_forward.1} parent=0 // pred_fallthru
    _
  // Predicated region
  $region78: #{multimodal_simclr_forward.1} parent=0 // pred_check
    _
  $region79: #{multimodal_simclr_forward.1} parent=0 // pred_check_branch
    %65 = sbr.rel (0) target = $region81
  $region80: #{multimodal_simclr_forward.1} parent=0 // pred_region
    _
  $region81: #{multimodal_simclr_forward.1} parent=0 // pred_fallthru
    _
  // Predicated region
  $region82: #{multimodal_simclr_forward.1} parent=0 // pred_check
    _
  $region83: #{multimodal_simclr_forward.1} parent=0 // pred_check_branch
    %67 = sbr.rel (0) target = $region85
  $region84: #{multimodal_simclr_forward.1} parent=0 // pred_region
    _
  $region85: #{multimodal_simclr_forward.1} parent=0 // pred_fallthru
    _
  %v68 = vld [vmem:[%s0] sm:$0x3]
  %v69 = vld [vmem:[%s1] sm:$0xff]
  %v70 = vld [vmem:[%s2] sm:$0x1]
  %v72 = vlaneseq
  %v73 = vshrl.u32 %v72, 7
  %v74 = vsub.s32 0, %v73
  %v75 = vrot.slane %v70, %v74
  %vm77 = vcmask 64512
  %v79 = vsel %vm77, %v68, 0
  %81 = vmatprep.subr.mxu0 0.0
  %82 = vmatpush1.msra.mxu0 %v69
  %83 = vmatprep.subr.mxu0 0.0
  %84 = vmatpush1.msra.mxu0 0.0
  %85 = vmatprep.subr.mxu0 0.0
  %86 = vmatpush1.msra.mxu0 0.0
  %87 = vmatprep.subr.mxu0 0.0
  %88 = vmatpush1.msra.mxu0 0.0
  %89 = vmatprep.subr.mxu0 0.0
  %90 = vmatpush1.msra.mxu0 0.0
  %91 = vmatprep.subr.mxu0 0.0
  %92 = vmatpush1.msra.mxu0 0.0
  %93 = vmatprep.subr.mxu0 0.0
  %94 = vmatpush1.msra.mxu0 0.0
  %95 = vmatprep.subr.mxu0 0.0
  %96 = vmatpush1.msra.mxu0 0.0
  %97 = vmatprep.subr.mxu0 0.0
  %98 = vmatpush1.msra.mxu0 0.0
  %99 = vmatprep.subr.mxu0 0.0
  %100 = vmatpush1.msra.mxu0 0.0
  %101 = vmatprep.subr.mxu0 0.0
  %102 = vmatpush1.msra.mxu0 0.0
  %103 = vmatprep.subr.mxu0 0.0
  %104 = vmatpush1.msra.mxu0 0.0
  %105 = vmatprep.subr.mxu0 0.0
  %106 = vmatpush1.msra.mxu0 0.0
  %107 = vmatprep.subr.mxu0 0.0
  %108 = vmatpush1.msra.mxu0 0.0
  %109 = vmatprep.subr.mxu0 0.0
  %110 = vmatpush1.msra.mxu0 0.0
  %111 = vmatprep.subr.mxu0 0.0
  %112 = vmatpush1.msra.mxu0 0.0
  %113 = vmatprep.subr.mxu0 0.0
  %114 = vmatpush1.msra.mxu0 0.0
  %115 = vmatprep.subr.mxu0 0.0
  %116 = vmatpush1.msra.mxu0 0.0
  %117 = vmatprep.subr.mxu0 0.0
  %118 = vmatpush1.msra.mxu0 0.0
  %119 = vmatprep.subr.mxu0 0.0
  %120 = vmatpush1.msra.mxu0 0.0
  %121 = vmatprep.subr.mxu0 0.0
  %122 = vmatpush1.msra.mxu0 0.0
  %123 = vmatprep.subr.mxu0 0.0
  %124 = vmatpush1.msra.mxu0 0.0
  %125 = vmatprep.subr.mxu0 0.0
  %126 = vmatpush1.msra.mxu0 0.0
  %127 = vmatprep.subr.mxu0 0.0
  %128 = vmatpush1.msra.mxu0 0.0
  %129 = vmatprep.subr.mxu0 0.0
  %130 = vmatpush1.msra.mxu0 0.0
  %131 = vmatprep.subr.mxu0 0.0
  %132 = vmatpush1.msra.mxu0 0.0
  %133 = vmatprep.subr.mxu0 0.0
  %134 = vmatpush1.msra.mxu0 0.0
  %135 = vmatprep.subr.mxu0 0.0
  %136 = vmatpush1.msra.mxu0 0.0
  %137 = vmatprep.subr.mxu0 0.0
  %138 = vmatpush1.msra.mxu0 0.0
  %139 = vmatprep.subr.mxu0 0.0
  %140 = vmatpush1.msra.mxu0 0.0
  %141 = vmatprep.subr.mxu0 0.0
  %142 = vmatpush1.msra.mxu0 0.0
  %143 = vmatprep.subr.mxu0 0.0
  %144 = vmatpush1.msra.mxu0 0.0
  %145 = vmatprep.mubr.f32.mxu0 0.0
  %146 = vmatmul.mubr.f32.gmra.mrb[0].mxu0 %v79
  %v147 = vpop.f32.mrb[0].mxu0
  %v148 = vadd.f32 %v75, %v147
  %v149 = vpop.f32.mrb[0].mxu0
  %150 = vdwg.mxu0
  %v151 = vld [vmem:[%s3] sm:$0xff]
  %v152 = vld [vmem:[%s3 + $0x8] sm:$0x3]
  %v153 = vld [vmem:[%s7] sm:$0xff]
  %v154 = vld [vmem:[%s7 + $0x8] sm:$0xff]
  %v155 = vld [vmem:[%s7 + $0x10] sm:$0xff]
  %v156 = vld [vmem:[%s7 + $0x18] sm:$0xff]
  %v157 = vld [vmem:[%s7 + $0x20] sm:$0xff]
  %v158 = vld [vmem:[%s7 + $0x28] sm:$0xff]
  %v159 = vld [vmem:[%s7 + $0x30] sm:$0xff]
  %v160 = vld [vmem:[%s7 + $0x38] sm:$0xff]
  %v161 = vld [vmem:[%s7 + $0x40] sm:$0xff]
  %v162 = vld [vmem:[%s7 + $0x48] sm:$0xff]
  %v163 = vld [vmem:[%s7 + $0x50] sm:$0xff]
  %v164 = vld [vmem:[%s7 + $0x58] sm:$0xff]
  %vm165 = vcmask 261120
  %v167 = vsel %vm165, %v151, 0
  %v170 = vsel %vm165, %v152, 0
  %172 = vmatprep.subr.mxu0 %v154
  %173 = vmatpush1.msra.mxu0 %v153
  %174 = vmatprep.subr.mxu0 %v157
  %175 = vmatpush1.msra.mxu0 %v156
  %176 = vmatprep.subr.mxu0 %v160
  %177 = vmatpush1.msra.mxu0 %v159
  %178 = vmatprep.subr.mxu0 %v163
  %179 = vmatpush1.msra.mxu0 %v162
  %180 = vmatprep.subr.mxu0 0.0
  %181 = vmatpush1.msra.mxu0 0.0
  %182 = vmatprep.subr.mxu0 0.0
  %183 = vmatpush1.msra.mxu0 0.0
  %184 = vmatprep.subr.mxu0 0.0
  %185 = vmatpush1.msra.mxu0 0.0
  %186 = vmatprep.subr.mxu0 0.0
  %187 = vmatpush1.msra.mxu0 0.0
  %188 = vmatprep.subr.mxu0 0.0
  %189 = vmatpush1.msra.mxu0 0.0
  %190 = vmatprep.subr.mxu0 0.0
  %191 = vmatpush1.msra.mxu0 0.0
  %192 = vmatprep.subr.mxu0 0.0
  %193 = vmatpush1.msra.mxu0 0.0
  %194 = vmatprep.subr.mxu0 0.0
  %195 = vmatpush1.msra.mxu0 0.0
  %196 = vmatprep.subr.mxu0 0.0
  %197 = vmatpush1.msra.mxu0 0.0
  %198 = vmatprep.subr.mxu0 0.0
  %199 = vmatpush1.msra.mxu0 0.0
  %200 = vmatprep.subr.mxu0 0.0
  %201 = vmatpush1.msra.mxu0 0.0
  %202 = vmatprep.subr.mxu0 0.0
  %203 = vmatpush1.msra.mxu0 0.0
  %204 = vmatprep.subr.mxu0 0.0
  %205 = vmatpush1.msra.mxu0 0.0
  %206 = vmatprep.subr.mxu0 0.0
  %207 = vmatpush1.msra.mxu0 0.0
  %208 = vmatprep.subr.mxu0 0.0
  %209 = vmatpush1.msra.mxu0 0.0
  %210 = vmatprep.subr.mxu0 0.0
  %211 = vmatpush1.msra.mxu0 0.0
  %212 = vmatprep.subr.mxu0 0.0
  %213 = vmatpush1.msra.mxu0 0.0
  %214 = vmatprep.subr.mxu0 0.0
  %215 = vmatpush1.msra.mxu0 0.0
  %216 = vmatprep.subr.mxu0 0.0
  %217 = vmatpush1.msra.mxu0 0.0
  %218 = vmatprep.subr.mxu0 0.0
  %219 = vmatpush1.msra.mxu0 0.0
  %220 = vmatprep.subr.mxu0 0.0
  %221 = vmatpush1.msra.mxu0 0.0
  %222 = vmatprep.subr.mxu0 0.0
  %223 = vmatpush1.msra.mxu0 0.0
  %224 = vmatprep.subr.mxu0 0.0
  %225 = vmatpush1.msra.mxu0 0.0
  %226 = vmatprep.subr.mxu0 0.0
  %227 = vmatpush1.msra.mxu0 0.0
  %228 = vmatprep.subr.mxu0 0.0
  %229 = vmatpush1.msra.mxu0 0.0
  %230 = vmatprep.subr.mxu0 0.0
  %231 = vmatpush1.msra.mxu0 0.0
  %232 = vmatprep.subr.mxu0 0.0
  %233 = vmatpush1.msra.mxu0 0.0
  %234 = vmatprep.subr.mxu0 0.0
  %235 = vmatpush1.msra.mxu0 0.0
  %236 = vmatprep.mubr.f32.mxu0 0.0
  %237 = vmatmul.mubr.f32.gmra.mrb[0].mxu0 %v167
  %v238 = vpop.f32.mrb[0].mxu0
  %v239 = vadd.f32 0.0, %v238
  %v240 = vpop.f32.mrb[0].mxu0
  %v241 = vadd.f32 0.0, %v240
  %242 = vmatprep.mubr.f32.mxu0 0.0
  %243 = vmatmul.mubr.f32.gmra.mrb[0].mxu0 %v170
  %v244 = vpop.f32.mrb[0].mxu0
  %v245 = vadd.f32 0.0, %v244
  %v246 = vpop.f32.mrb[0].mxu0
  %v247 = vadd.f32 0.0, %v246
  %248 = vdwg.mxu0
  %249 = vmatprep.subr.mxu0 0.0
  %250 = vmatpush1.msra.mxu0 %v155
  %251 = vmatprep.subr.mxu0 0.0
  %252 = vmatpush1.msra.mxu0 %v158
  %253 = vmatprep.subr.mxu0 0.0
  %254 = vmatpush1.msra.mxu0 %v161
  %255 = vmatprep.subr.mxu0 0.0
  %256 = vmatpush1.msra.mxu0 %v164
  %257 = vmatprep.subr.mxu0 0.0
  %258 = vmatpush1.msra.mxu0 0.0
  %259 = vmatprep.subr.mxu0 0.0
  %260 = vmatpush1.msra.mxu0 0.0
  %261 = vmatprep.subr.mxu0 0.0
  %262 = vmatpush1.msra.mxu0 0.0
  %263 = vmatprep.subr.mxu0 0.0
  %264 = vmatpush1.msra.mxu0 0.0
  %265 = vmatprep.subr.mxu0 0.0
  %266 = vmatpush1.msra.mxu0 0.0
  %267 = vmatprep.subr.mxu0 0.0
  %268 = vmatpush1.msra.mxu0 0.0
  %269 = vmatprep.subr.mxu0 0.0
  %270 = vmatpush1.msra.mxu0 0.0
  %271 = vmatprep.subr.mxu0 0.0
  %272 = vmatpush1.msra.mxu0 0.0
  %273 = vmatprep.subr.mxu0 0.0
  %274 = vmatpush1.msra.mxu0 0.0
  %275 = vmatprep.subr.mxu0 0.0
  %276 = vmatpush1.msra.mxu0 0.0
  %277 = vmatprep.subr.mxu0 0.0
  %278 = vmatpush1.msra.mxu0 0.0
  %279 = vmatprep.subr.mxu0 0.0
  %280 = vmatpush1.msra.mxu0 0.0
  %281 = vmatprep.subr.mxu0 0.0
  %282 = vmatpush1.msra.mxu0 0.0
  %283 = vmatprep.subr.mxu0 0.0
  %284 = vmatpush1.msra.mxu0 0.0
  %285 = vmatprep.subr.mxu0 0.0
  %286 = vmatpush1.msra.mxu0 0.0
  %287 = vmatprep.subr.mxu0 0.0
  %288 = vmatpush1.msra.mxu0 0.0
  %289 = vmatprep.subr.mxu0 0.0
  %290 = vmatpush1.msra.mxu0 0.0
  %291 = vmatprep.subr.mxu0 0.0
  %292 = vmatpush1.msra.mxu0 0.0
  %293 = vmatprep.subr.mxu0 0.0
  %294 = vmatpush1.msra.mxu0 0.0
  %295 = vmatprep.subr.mxu0 0.0
  %296 = vmatpush1.msra.mxu0 0.0
  %297 = vmatprep.subr.mxu0 0.0
  %298 = vmatpush1.msra.mxu0 0.0
  %299 = vmatprep.subr.mxu0 0.0
  %300 = vmatpush1.msra.mxu0 0.0
  %301 = vmatprep.subr.mxu0 0.0
  %302 = vmatpush1.msra.mxu0 0.0
  %303 = vmatprep.subr.mxu0 0.0
  %304 = vmatpush1.msra.mxu0 0.0
  %305 = vmatprep.subr.mxu0 0.0
  %306 = vmatpush1.msra.mxu0 0.0
  %307 = vmatprep.subr.mxu0 0.0
  %308 = vmatpush1.msra.mxu0 0.0
  %309 = vmatprep.subr.mxu0 0.0
  %310 = vmatpush1.msra.mxu0 0.0
  %311 = vmatprep.subr.mxu0 0.0
  %312 = vmatpush1.msra.mxu0 0.0
  %313 = vmatprep.mubr.f32.mxu0 0.0
  %314 = vmatmul.mubr.f32.gmra.mrb[0].mxu0 %v167
  %v315 = vpop.f32.mrb[0].mxu0
  %v316 = vadd.f32 0.0, %v315
  %v317 = vpop.f32.mrb[0].mxu0
  %318 = vmatprep.mubr.f32.mxu0 0.0
  %319 = vmatmul.mubr.f32.gmra.mrb[0].mxu0 %v170
  %v320 = vpop.f32.mrb[0].mxu0
  %v321 = vadd.f32 0.0, %v320
  %v322 = vpop.f32.mrb[0].mxu0
  %323 = vdwg.mxu0
  %324 = vmatprep.subr.mxu0 0.0
  %325 = vmatpush1.xpose.msra.mxu0 %v241
  %326 = vmatprep.subr.mxu0 0.0
  %327 = vmatpush1.xpose.msra.mxu0 %v247
  %328 = vmatprep.subr.mxu0 0.0
  %329 = vmatpush1.xpose.msra.mxu0 0.0
  %330 = vmatprep.subr.mxu0 0.0
  %331 = vmatpush1.xpose.msra.mxu0 0.0
  %332 = vmatprep.subr.mxu0 0.0
  %333 = vmatpush1.xpose.msra.mxu0 0.0
  %334 = vmatprep.subr.mxu0 0.0
  %335 = vmatpush1.xpose.msra.mxu0 0.0
  %336 = vmatprep.subr.mxu0 0.0
  %337 = vmatpush1.xpose.msra.mxu0 0.0
  %338 = vmatprep.subr.mxu0 0.0
  %339 = vmatpush1.xpose.msra.mxu0 0.0
  %340 = vmatprep.subr.mxu0 0.0
  %341 = vmatpush1.xpose.msra.mxu0 0.0
  %342 = vmatprep.subr.mxu0 0.0
  %343 = vmatpush1.xpose.msra.mxu0 0.0
  %344 = vmatprep.subr.mxu0 0.0
  %345 = vmatpush1.xpose.msra.mxu0 0.0
  %346 = vmatprep.subr.mxu0 0.0
  %347 = vmatpush1.xpose.msra.mxu0 0.0
  %348 = vmatprep.subr.mxu0 0.0
  %349 = vmatpush1.xpose.msra.mxu0 0.0
  %350 = vmatprep.subr.mxu0 0.0
  %351 = vmatpush1.xpose.msra.mxu0 0.0
  %352 = vmatprep.subr.mxu0 0.0
  %353 = vmatpush1.xpose.msra.mxu0 0.0
  %354 = vmatprep.subr.mxu0 0.0
  %355 = vmatpush1.xpose.msra.mxu0 0.0
  %356 = vmatprep.subr.mxu0 0.0
  %357 = vmatpush1.xpose.msra.mxu0 0.0
  %358 = vmatprep.subr.mxu0 0.0
  %359 = vmatpush1.xpose.msra.mxu0 0.0
  %360 = vmatprep.subr.mxu0 0.0
  %361 = vmatpush1.xpose.msra.mxu0 0.0
  %362 = vmatprep.subr.mxu0 0.0
  %363 = vmatpush1.xpose.msra.mxu0 0.0
  %364 = vmatprep.subr.mxu0 0.0
  %365 = vmatpush1.xpose.msra.mxu0 0.0
  %366 = vmatprep.subr.mxu0 0.0
  %367 = vmatpush1.xpose.msra.mxu0 0.0
  %368 = vmatprep.subr.mxu0 0.0
  %369 = vmatpush1.xpose.msra.mxu0 0.0
  %370 = vmatprep.subr.mxu0 0.0
  %371 = vmatpush1.xpose.msra.mxu0 0.0
  %372 = vmatprep.subr.mxu0 0.0
  %373 = vmatpush1.xpose.msra.mxu0 0.0
  %374 = vmatprep.subr.mxu0 0.0
  %375 = vmatpush1.xpose.msra.mxu0 0.0
  %376 = vmatprep.subr.mxu0 0.0
  %377 = vmatpush1.xpose.msra.mxu0 0.0
  %378 = vmatprep.subr.mxu0 0.0
  %379 = vmatpush1.xpose.msra.mxu0 0.0
  %380 = vmatprep.subr.mxu0 0.0
  %381 = vmatpush1.xpose.msra.mxu0 0.0
  %382 = vmatprep.subr.mxu0 0.0
  %383 = vmatpush1.xpose.msra.mxu0 0.0
  %384 = vmatprep.subr.mxu0 0.0
  %385 = vmatpush1.xpose.msra.mxu0 0.0
  %386 = vmatprep.subr.mxu0 0.0
  %387 = vmatpush1.xpose.msra.mxu0 0.0
  %388 = vmatprep.mubr.f32.mxu0 0.0
  %389 = vmatmul.mubr.f32.gmra.mrb[0].mxu0 %v239
  %v390 = vpop.f32.mrb[0].mxu0
  %v391 = vadd.f32 0.0, %v390
  %v392 = vpop.f32.mrb[0].mxu0
  %393 = vmatprep.mubr.f32.mxu0 0.0
  %394 = vmatmul.mubr.f32.gmra.mrb[0].mxu0 %v245
  %v395 = vpop.f32.mrb[0].mxu0
  %v396 = vadd.f32 0.0, %v395
  %v397 = vpop.f32.mrb[0].mxu0
  %398 = vdwg.mxu0
  %v399 = vmul.f32 %v391, 0.17677669
  %v400 = vmul.f32 %v396, 0.17677669
  %v401 = vld [vmem:[%s4] sm:$0xff]
  %v402 = vld [vmem:[%s4 + $0x8] sm:$0x3]
  %v403 = vadd.f32 %v399, %v401
  %v404 = vadd.f32 %v400, %v402
  %vm405 = vcmask 80896
  %v406 = vsel %vm405, %v403, -inf
  %407 = vmax.xlane.f32.xlu0 %v406
  %v408 = vpop.xlane.xlu0 %407
  %vm409 = vcmask 74752
  %v410 = vsel %vm409, %v404, -inf
  %411 = vmax.xlane.f32.xlu0 %v410
  %v412 = vpop.xlane.xlu0 %411
  %v413 = vsub.f32 %v403, %v408
  %v414 = vsub.f32 %v404, %v412
  %v415 = vmul.f32 %v413, 1.442695
  %v416 = vpow.pop %v415
  %v417 = vmul.f32 %v414, 1.442695
  %v418 = vpow.pop %v417
  %v419 = vsel %vm405, %v416, 0.0
  %420 = vadd.xlane.f32.xlu0 %v419
  %v421 = vpop.xlane.xlu0 %420
  %v422 = vsel %vm409, %v418, 0.0
  %423 = vadd.xlane.f32.xlu0 %v422
  %v424 = vpop.xlane.xlu0 %423
  %v425 = vrcp.pop %v421
  %v426 = vrcp.pop %v424
  %v427 = vmul.f32 %v416, %v425
  %v428 = vmul.f32 %v418, %v426
  %v430 = vsel %vm405, %v427, 0
  %v433 = vsel %vm405, %v428, 0
  %vm435 = vcmask 1041408
  %v437 = vsel %vm435, %v321, 0
  %439 = vmatprep.subr.mxu0 0.0
  %440 = vmatpush1.msra.mxu0 %v316
  %441 = vmatprep.subr.mxu0 0.0
  %442 = vmatpush1.msra.mxu0 %v437
  %443 = vmatprep.subr.mxu0 0.0
  %444 = vmatpush1.msra.mxu0 0.0
  %445 = vmatprep.subr.mxu0 0.0
  %446 = vmatpush1.msra.mxu0 0.0
  %447 = vmatprep.subr.mxu0 0.0
  %448 = vmatpush1.msra.mxu0 0.0
  %449 = vmatprep.subr.mxu0 0.0
  %450 = vmatpush1.msra.mxu0 0.0
  %451 = vmatprep.subr.mxu0 0.0
  %452 = vmatpush1.msra.mxu0 0.0
  %453 = vmatprep.subr.mxu0 0.0
  %454 = vmatpush1.msra.mxu0 0.0
  %455 = vmatprep.subr.mxu0 0.0
  %456 = vmatpush1.msra.mxu0 0.0
  %457 = vmatprep.subr.mxu0 0.0
  %458 = vmatpush1.msra.mxu0 0.0
  %459 = vmatprep.subr.mxu0 0.0
  %460 = vmatpush1.msra.mxu0 0.0
  %461 = vmatprep.subr.mxu0 0.0
  %462 = vmatpush1.msra.mxu0 0.0
  %463 = vmatprep.subr.mxu0 0.0
  %464 = vmatpush1.msra.mxu0 0.0
  %465 = vmatprep.subr.mxu0 0.0
  %466 = vmatpush1.msra.mxu0 0.0
  %467 = vmatprep.subr.mxu0 0.0
  %468 = vmatpush1.msra.mxu0 0.0
  %469 = vmatprep.subr.mxu0 0.0
  %470 = vmatpush1.msra.mxu0 0.0
  %471 = vmatprep.subr.mxu0 0.0
  %472 = vmatpush1.msra.mxu0 0.0
  %473 = vmatprep.subr.mxu0 0.0
  %474 = vmatpush1.msra.mxu0 0.0
  %475 = vmatprep.subr.mxu0 0.0
  %476 = vmatpush1.msra.mxu0 0.0
  %477 = vmatprep.subr.mxu0 0.0
  %478 = vmatpush1.msra.mxu0 0.0
  %479 = vmatprep.subr.mxu0 0.0
  %480 = vmatpush1.msra.mxu0 0.0
  %481 = vmatprep.subr.mxu0 0.0
  %482 = vmatpush1.msra.mxu0 0.0
  %483 = vmatprep.subr.mxu0 0.0
  %484 = vmatpush1.msra.mxu0 0.0
  %485 = vmatprep.subr.mxu0 0.0
  %486 = vmatpush1.msra.mxu0 0.0
  %487 = vmatprep.subr.mxu0 0.0
  %488 = vmatpush1.msra.mxu0 0.0
  %489 = vmatprep.subr.mxu0 0.0
  %490 = vmatpush1.msra.mxu0 0.0
  %491 = vmatprep.subr.mxu0 0.0
  %492 = vmatpush1.msra.mxu0 0.0
  %493 = vmatprep.subr.mxu0 0.0
  %494 = vmatpush1.msra.mxu0 0.0
  %495 = vmatprep.subr.mxu0 0.0
  %496 = vmatpush1.msra.mxu0 0.0
  %497 = vmatprep.subr.mxu0 0.0
  %498 = vmatpush1.msra.mxu0 0.0
  %499 = vmatprep.subr.mxu0 0.0
  %500 = vmatpush1.msra.mxu0 0.0
  %501 = vmatprep.subr.mxu0 0.0
  %502 = vmatpush1.msra.mxu0 0.0
  %503 = vmatprep.mubr.f32.mxu0 0.0
  %504 = vmatmul.mubr.f32.gmra.mrb[0].mxu0 %v430
  %v505 = vpop.f32.mrb[0].mxu0
  %v506 = vadd.f32 0.0, %v505
  %v507 = vpop.f32.mrb[0].mxu0
  %508 = vmatprep.mubr.f32.mxu0 0.0
  %509 = vmatmul.mubr.f32.gmra.mrb[0].mxu0 %v433
  %v510 = vpop.f32.mrb[0].mxu0
  %v511 = vadd.f32 0.0, %v510
  %v512 = vpop.f32.mrb[0].mxu0
  %513 = vdwg.mxu0
  %v514 = vld [vmem:[%s8] sm:$0xff]
  %v515 = vld [vmem:[%s8 + $0x8] sm:$0xff]
  %v516 = vld [vmem:[%s8 + $0x10] sm:$0xff]
  %v517 = vld [vmem:[%s8 + $0x18] sm:$0xff]
  %v518 = vld [vmem:[%s8 + $0x20] sm:$0xff]
  %v519 = vld [vmem:[%s8 + $0x28] sm:$0xff]
  %v520 = vld [vmem:[%s8 + $0x30] sm:$0xff]
  %v521 = vld [vmem:[%s8 + $0x38] sm:$0xff]
  %v522 = vld [vmem:[%s8 + $0x40] sm:$0xff]
  %v523 = vld [vmem:[%s8 + $0x48] sm:$0xff]
  %v524 = vld [vmem:[%s8 + $0x50] sm:$0xff]
  %v525 = vld [vmem:[%s8 + $0x58] sm:$0xff]
  %v526 = vld [vmem:[%s8 + $0x60] sm:$0xff]
  %v527 = vld [vmem:[%s8 + $0x68] sm:$0xff]
  %v528 = vld [vmem:[%s8 + $0x70] sm:$0xff]
  %v529 = vld [vmem:[%s8 + $0x78] sm:$0xff]
  %530 = vmatprep.subr.mxu0 0.0
  %531 = vmatpush1.msra.mxu0 %v514
  %532 = vmatprep.subr.mxu0 0.0
  %533 = vmatpush1.msra.mxu0 %v515
  %534 = vmatprep.subr.mxu0 0.0
  %535 = vmatpush1.msra.mxu0 %v516
  %536 = vmatprep.subr.mxu0 0.0
  %537 = vmatpush1.msra.mxu0 %v517
  %538 = vmatprep.subr.mxu0 0.0
  %539 = vmatpush1.msra.mxu0 %v518
  %540 = vmatprep.subr.mxu0 0.0
  %541 = vmatpush1.msra.mxu0 %v519
  %542 = vmatprep.subr.mxu0 0.0
  %543 = vmatpush1.msra.mxu0 %v520
  %544 = vmatprep.subr.mxu0 0.0
  %545 = vmatpush1.msra.mxu0 %v521
  %546 = vmatprep.subr.mxu0 0.0
  %547 = vmatpush1.msra.mxu0 %v522
  %548 = vmatprep.subr.mxu0 0.0
  %549 = vmatpush1.msra.mxu0 %v523
  %550 = vmatprep.subr.mxu0 0.0
  %551 = vmatpush1.msra.mxu0 %v524
  %552 = vmatprep.subr.mxu0 0.0
  %553 = vmatpush1.msra.mxu0 %v525
  %554 = vmatprep.subr.mxu0 0.0
  %555 = vmatpush1.msra.mxu0 %v526
  %556 = vmatprep.subr.mxu0 0.0
  %557 = vmatpush1.msra.mxu0 %v527
  %558 = vmatprep.subr.mxu0 0.0
  %559 = vmatpush1.msra.mxu0 %v528
  %560 = vmatprep.subr.mxu0 0.0
  %561 = vmatpush1.msra.mxu0 %v529
  %562 = vmatprep.subr.mxu0 0.0
  %563 = vmatpush1.msra.mxu0 0.0
  %564 = vmatprep.subr.mxu0 0.0
  %565 = vmatpush1.msra.mxu0 0.0
  %566 = vmatprep.subr.mxu0 0.0
  %567 = vmatpush1.msra.mxu0 0.0
  %568 = vmatprep.subr.mxu0 0.0
  %569 = vmatpush1.msra.mxu0 0.0
  %570 = vmatprep.subr.mxu0 0.0
  %571 = vmatpush1.msra.mxu0 0.0
  %572 = vmatprep.subr.mxu0 0.0
  %573 = vmatpush1.msra.mxu0 0.0
  %574 = vmatprep.subr.mxu0 0.0
  %575 = vmatpush1.msra.mxu0 0.0
  %576 = vmatprep.subr.mxu0 0.0
  %577 = vmatpush1.msra.mxu0 0.0
  %578 = vmatprep.subr.mxu0 0.0
  %579 = vmatpush1.msra.mxu0 0.0
  %580 = vmatprep.subr.mxu0 0.0
  %581 = vmatpush1.msra.mxu0 0.0
  %582 = vmatprep.subr.mxu0 0.0
  %583 = vmatpush1.msra.mxu0 0.0
  %584 = vmatprep.subr.mxu0 0.0
  %585 = vmatpush1.msra.mxu0 0.0
  %586 = vmatprep.subr.mxu0 0.0
  %587 = vmatpush1.msra.mxu0 0.0
  %588 = vmatprep.subr.mxu0 0.0
  %589 = vmatpush1.msra.mxu0 0.0
  %590 = vmatprep.subr.mxu0 0.0
  %591 = vmatpush1.msra.mxu0 0.0
  %592 = vmatprep.subr.mxu0 0.0
  %593 = vmatpush1.msra.mxu0 0.0
  %594 = vmatprep.mubr.f32.mxu0 0.0
  %595 = vmatmul.mubr.f32.gmra.mrb[0].mxu0 %v506
  %v596 = vpop.f32.mrb[0].mxu0
  %v597 = vadd.f32 0.0, %v596
  %v598 = vpop.f32.mrb[0].mxu0
  %599 = vmatprep.mubr.f32.mxu0 0.0
  %600 = vmatmul.mubr.f32.gmra.mrb[0].mxu0 %v511
  %v601 = vpop.f32.mrb[0].mxu0
  %v602 = vadd.f32 0.0, %v601
  %v603 = vpop.f32.mrb[0].mxu0
  %604 = vdwg.mxu0
  %v605 = vadd.f32 %v151, %v597
  %v606 = vadd.f32 %v152, %v602
  %v607 = vld [vmem:[%s9] sm:$0x1]
  %v608 = vld [vmem:[%s10] sm:$0x1]
  %v609 = vsel %vm165, %v605, 0.0
  %610 = vadd.xlane.f32.xlu0 %v609
  %v611 = vpop.xlane.xlu0 %610
  %vm612 = vcmask 254976
  %v613 = vsel %vm612, %v606, 0.0
  %614 = vadd.xlane.f32.xlu0 %v613
  %v615 = vpop.xlane.xlu0 %614
  %v616 = vrcp.pop 32.0
  %v617 = vmul.f32 %v611, %v616
  %v618 = vmul.f32 %v615, %v616
  %v619 = vsub.f32 %v605, %v617
  %v620 = vsub.f32 %v606, %v618
  %v621 = vmul.f32 %v619, %v619
  %v622 = vmul.f32 %v620, %v620
  %v623 = vsel %vm165, %v621, 0.0
  %624 = vadd.xlane.f32.xlu0 %v623
  %v625 = vpop.xlane.xlu0 %624
  %v626 = vsel %vm612, %v622, 0.0
  %627 = vadd.xlane.f32.xlu0 %v626
  %v628 = vpop.xlane.xlu0 %627
  %v629 = vmul.f32 %v625, %v616
  %v630 = vmul.f32 %v628, %v616
  %v631 = vadd.f32 %v629, 1e-05
  %v632 = vadd.f32 %v630, 1e-05
  %v633 = vrsqrt.pop %v631
  %v634 = vrsqrt.pop %v632
  %v635 = vmul.f32 %v619, %v633
  %v636 = vmul.f32 %v620, %v634
  %v638 = vlaneseq
  %v639 = vshrl.u32 %v638, 7
  %v640 = vsub.s32 0, %v639
  %v641 = vrot.slane %v607, %v640
  %v643 = vmul.f32 %v635, %v641
  %v644 = vmul.f32 %v636, %v641
  %v646 = vlaneseq
  %v647 = vshrl.u32 %v646, 7
  %v648 = vsub.s32 0, %v647
  %v649 = vrot.slane %v608, %v648
  %v651 = vadd.f32 %v643, %v649
  %v652 = vadd.f32 %v644, %v649
  %v653 = vld [vmem:[%s11] sm:$0xff]
  %v654 = vld [vmem:[%s11 + $0x8] sm:$0xff]
  %v655 = vld [vmem:[%s11 + $0x10] sm:$0xff]
  %v656 = vld [vmem:[%s11 + $0x18] sm:$0xff]
  %v657 = vld [vmem:[%s12] sm:$0x1]
  %v659 = vlaneseq
  %v660 = vshrl.u32 %v659, 7
  %v661 = vsub.s32 0, %v660
  %v662 = vrot.slane %v657, %v661
  %v665 = vsel %vm165, %v651, 0
  %v668 = vsel %vm165, %v652, 0
  %670 = vmatprep.subr.mxu0 0.0
  %671 = vmatpush1.msra.mxu0 %v653
  %672 = vmatprep.subr.mxu0 0.0
  %673 = vmatpush1.msra.mxu0 %v654
  %674 = vmatprep.subr.mxu0 0.0
  %675 = vmatpush1.msra.mxu0 %v655
  %676 = vmatprep.subr.mxu0 0.0
  %677 = vmatpush1.msra.mxu0 %v656
  %678 = vmatprep.subr.mxu0 0.0
  %679 = vmatpush1.msra.mxu0 0.0
  %680 = vmatprep.subr.mxu0 0.0
  %681 = vmatpush1.msra.mxu0 0.0
  %682 = vmatprep.subr.mxu0 0.0
  %683 = vmatpush1.msra.mxu0 0.0
  %684 = vmatprep.subr.mxu0 0.0
  %685 = vmatpush1.msra.mxu0 0.0
  %686 = vmatprep.subr.mxu0 0.0
  %687 = vmatpush1.msra.mxu0 0.0
  %688 = vmatprep.subr.mxu0 0.0
  %689 = vmatpush1.msra.mxu0 0.0
  %690 = vmatprep.subr.mxu0 0.0
  %691 = vmatpush1.msra.mxu0 0.0
  %692 = vmatprep.subr.mxu0 0.0
  %693 = vmatpush1.msra.mxu0 0.0
  %694 = vmatprep.subr.mxu0 0.0
  %695 = vmatpush1.msra.mxu0 0.0
  %696 = vmatprep.subr.mxu0 0.0
  %697 = vmatpush1.msra.mxu0 0.0
  %698 = vmatprep.subr.mxu0 0.0
  %699 = vmatpush1.msra.mxu0 0.0
  %700 = vmatprep.subr.mxu0 0.0
  %701 = vmatpush1.msra.mxu0 0.0
  %702 = vmatprep.subr.mxu0 0.0
  %703 = vmatpush1.msra.mxu0 0.0
  %704 = vmatprep.subr.mxu0 0.0
  %705 = vmatpush1.msra.mxu0 0.0
  %706 = vmatprep.subr.mxu0 0.0
  %707 = vmatpush1.msra.mxu0 0.0
  %708 = vmatprep.subr.mxu0 0.0
  %709 = vmatpush1.msra.mxu0 0.0
  %710 = vmatprep.subr.mxu0 0.0
  %711 = vmatpush1.msra.mxu0 0.0
  %712 = vmatprep.subr.mxu0 0.0
  %713 = vmatpush1.msra.mxu0 0.0
  %714 = vmatprep.subr.mxu0 0.0
  %715 = vmatpush1.msra.mxu0 0.0
  %716 = vmatprep.subr.mxu0 0.0
  %717 = vmatpush1.msra.mxu0 0.0
  %718 = vmatprep.subr.mxu0 0.0
  %719 = vmatpush1.msra.mxu0 0.0
  %720 = vmatprep.subr.mxu0 0.0
  %721 = vmatpush1.msra.mxu0 0.0
  %722 = vmatprep.subr.mxu0 0.0
  %723 = vmatpush1.msra.mxu0 0.0
  %724 = vmatprep.subr.mxu0 0.0
  %725 = vmatpush1.msra.mxu0 0.0
  %726 = vmatprep.subr.mxu0 0.0
  %727 = vmatpush1.msra.mxu0 0.0
  %728 = vmatprep.subr.mxu0 0.0
  %729 = vmatpush1.msra.mxu0 0.0
  %730 = vmatprep.subr.mxu0 0.0
  %731 = vmatpush1.msra.mxu0 0.0
  %732 = vmatprep.subr.mxu0 0.0
  %733 = vmatpush1.msra.mxu0 0.0
  %734 = vmatprep.mubr.f32.mxu0 0.0
  %735 = vmatmul.mubr.f32.gmra.mrb[0].mxu0 %v665
  %v736 = vpop.f32.mrb[0].mxu0
  %v737 = vadd.f32 %v662, %v736
  %v738 = vpop.f32.mrb[0].mxu0
  %739 = vmatprep.mubr.f32.mxu0 0.0
  %740 = vmatmul.mubr.f32.gmra.mrb[0].mxu0 %v668
  %v741 = vpop.f32.mrb[0].mxu0
  %v742 = vadd.f32 %v662, %v741
  %v743 = vpop.f32.mrb[0].mxu0
  %744 = vdwg.mxu0
  %v745 = vmax.f32 %v737, 0.0
  %v746 = vmax.f32 %v742, 0.0
  %v747 = vld [vmem:[%s13] sm:$0xff]
  %v748 = vld [vmem:[%s13 + $0x8] sm:$0xff]
  %v749 = vld [vmem:[%s13 + $0x10] sm:$0xff]
  %v750 = vld [vmem:[%s13 + $0x18] sm:$0xff]
  %v751 = vld [vmem:[%s13 + $0x20] sm:$0xff]
  %v752 = vld [vmem:[%s13 + $0x28] sm:$0xff]
  %v753 = vld [vmem:[%s13 + $0x30] sm:$0xff]
  %v754 = vld [vmem:[%s13 + $0x38] sm:$0xff]
  %vm755 = vcmask 523264
  %v757 = vsel %vm755, %v745, 0
  %v760 = vsel %vm755, %v746, 0
  %762 = vmatprep.subr.mxu0 0.0
  %763 = vmatpush1.msra.mxu0 %v747
  %764 = vmatprep.subr.mxu0 0.0
  %765 = vmatpush1.msra.mxu0 %v748
  %766 = vmatprep.subr.mxu0 0.0
  %767 = vmatpush1.msra.mxu0 %v749
  %768 = vmatprep.subr.mxu0 0.0
  %769 = vmatpush1.msra.mxu0 %v750
  %770 = vmatprep.subr.mxu0 0.0
  %771 = vmatpush1.msra.mxu0 %v751
  %772 = vmatprep.subr.mxu0 0.0
  %773 = vmatpush1.msra.mxu0 %v752
  %774 = vmatprep.subr.mxu0 0.0
  %775 = vmatpush1.msra.mxu0 %v753
  %776 = vmatprep.subr.mxu0 0.0
  %777 = vmatpush1.msra.mxu0 %v754
  %778 = vmatprep.subr.mxu0 0.0
  %779 = vmatpush1.msra.mxu0 0.0
  %780 = vmatprep.subr.mxu0 0.0
  %781 = vmatpush1.msra.mxu0 0.0
  %782 = vmatprep.subr.mxu0 0.0
  %783 = vmatpush1.msra.mxu0 0.0
  %784 = vmatprep.subr.mxu0 0.0
  %785 = vmatpush1.msra.mxu0 0.0
  %786 = vmatprep.subr.mxu0 0.0
  %787 = vmatpush1.msra.mxu0 0.0
  %788 = vmatprep.subr.mxu0 0.0
  %789 = vmatpush1.msra.mxu0 0.0
  %790 = vmatprep.subr.mxu0 0.0
  %791 = vmatpush1.msra.mxu0 0.0
  %792 = vmatprep.subr.mxu0 0.0
  %793 = vmatpush1.msra.mxu0 0.0
  %794 = vmatprep.subr.mxu0 0.0
  %795 = vmatpush1.msra.mxu0 0.0
  %796 = vmatprep.subr.mxu0 0.0
  %797 = vmatpush1.msra.mxu0 0.0
  %798 = vmatprep.subr.mxu0 0.0
  %799 = vmatpush1.msra.mxu0 0.0
  %800 = vmatprep.subr.mxu0 0.0
  %801 = vmatpush1.msra.mxu0 0.0
  %802 = vmatprep.subr.mxu0 0.0
  %803 = vmatpush1.msra.mxu0 0.0
  %804 = vmatprep.subr.mxu0 0.0
  %805 = vmatpush1.msra.mxu0 0.0
  %806 = vmatprep.subr.mxu0 0.0
  %807 = vmatpush1.msra.mxu0 0.0
  %808 = vmatprep.subr.mxu0 0.0
  %809 = vmatpush1.msra.mxu0 0.0
  %810 = vmatprep.subr.mxu0 0.0
  %811 = vmatpush1.msra.mxu0 0.0
  %812 = vmatprep.subr.mxu0 0.0
  %813 = vmatpush1.msra.mxu0 0.0
  %814 = vmatprep.subr.mxu0 0.0
  %815 = vmatpush1.msra.mxu0 0.0
  %816 = vmatprep.subr.mxu0 0.0
  %817 = vmatpush1.msra.mxu0 0.0
  %818 = vmatprep.subr.mxu0 0.0
  %819 = vmatpush1.msra.mxu0 0.0
  %820 = vmatprep.subr.mxu0 0.0
  %821 = vmatpush1.msra.mxu0 0.0
  %822 = vmatprep.subr.mxu0 0.0
  %823 = vmatpush1.msra.mxu0 0.0
  %824 = vmatprep.subr.mxu0 0.0
  %825 = vmatpush1.msra.mxu0 0.0
  %826 = vmatprep.mubr.f32.mxu0 0.0
  %827 = vmatmul.mubr.f32.gmra.mrb[0].mxu0 %v757
  %v828 = vpop.f32.mrb[0].mxu0
  %v829 = vadd.f32 0.0, %v828
  %v830 = vpop.f32.mrb[0].mxu0
  %831 = vmatprep.mubr.f32.mxu0 0.0
  %832 = vmatmul.mubr.f32.gmra.mrb[0].mxu0 %v760
  %v833 = vpop.f32.mrb[0].mxu0
  %v834 = vadd.f32 0.0, %v833
  %v835 = vpop.f32.mrb[0].mxu0
  %836 = vdwg.mxu0
  %v837 = vadd.f32 %v651, %v829
  %v838 = vadd.f32 %v652, %v834
  %v839 = vld [vmem:[%s14] sm:$0x1]
  %v841 = vlaneseq
  %v842 = vshrl.u32 %v841, 7
  %v843 = vsub.s32 0, %v842
  %v844 = vrot.slane %v839, %v843
  %v846 = vadd.f32 %v837, %v844
  %v847 = vadd.f32 %v838, %v844
  %v848 = vld [vmem:[%s15] sm:$0x1]
  %v849 = vld [vmem:[%s16] sm:$0x1]
  %v850 = vsel %vm165, %v846, 0.0
  %851 = vadd.xlane.f32.xlu0 %v850
  %v852 = vpop.xlane.xlu0 %851
  %v853 = vsel %vm612, %v847, 0.0
  %854 = vadd.xlane.f32.xlu0 %v853
  %v855 = vpop.xlane.xlu0 %854
  %v856 = vmul.f32 %v852, %v616
  %v857 = vmul.f32 %v855, %v616
  %v858 = vsub.f32 %v846, %v856
  %v859 = vsub.f32 %v847, %v857
  %v860 = vmul.f32 %v858, %v858
  %v861 = vmul.f32 %v859, %v859
  %v862 = vsel %vm165, %v860, 0.0
  %863 = vadd.xlane.f32.xlu0 %v862
  %v864 = vpop.xlane.xlu0 %863
  %v865 = vsel %vm612, %v861, 0.0
  %866 = vadd.xlane.f32.xlu0 %v865
  %v867 = vpop.xlane.xlu0 %866
  %v868 = vmul.f32 %v864, %v616
  %v869 = vmul.f32 %v867, %v616
  %v870 = vadd.f32 %v868, 1e-05
  %v871 = vadd.f32 %v869, 1e-05
  %v872 = vrsqrt.pop %v870
  %v873 = vrsqrt.pop %v871
  %v874 = vmul.f32 %v858, %v872
  %v875 = vmul.f32 %v859, %v873
  %v877 = vlaneseq
  %v878 = vshrl.u32 %v877, 7
  %v879 = vsub.s32 0, %v878
  %v880 = vrot.slane %v848, %v879
  %v882 = vmul.f32 %v874, %v880
  %v883 = vmul.f32 %v875, %v880
  %v885 = vlaneseq
  %v886 = vshrl.u32 %v885, 7
  %v887 = vsub.s32 0, %v886
  %v888 = vrot.slane %v849, %v887
  %v890 = vadd.f32 %v882, %v888
  %v891 = vadd.f32 %v883, %v888
  %v892 = vld [vmem:[%s5] sm:$0xf]
  %v893 = vld [vmem:[%s6] sm:$0xf]
  %v895 = vsel %vm405, %v893, 0
  %v898 = vsel %vm435, %v891, 0
  %900 = vmatprep.subr.mxu0 0.0
  %901 = vmatpush1.msra.mxu0 %v890
  %902 = vmatprep.subr.mxu0 0.0
  %903 = vmatpush1.msra.mxu0 %v898
  %904 = vmatprep.subr.mxu0 0.0
  %905 = vmatpush1.msra.mxu0 0.0
  %906 = vmatprep.subr.mxu0 0.0
  %907 = vmatpush1.msra.mxu0 0.0
  %908 = vmatprep.subr.mxu0 0.0
  %909 = vmatpush1.msra.mxu0 0.0
  %910 = vmatprep.subr.mxu0 0.0
  %911 = vmatpush1.msra.mxu0 0.0
  %912 = vmatprep.subr.mxu0 0.0
  %913 = vmatpush1.msra.mxu0 0.0
  %914 = vmatprep.subr.mxu0 0.0
  %915 = vmatpush1.msra.mxu0 0.0
  %916 = vmatprep.subr.mxu0 0.0
  %917 = vmatpush1.msra.mxu0 0.0
  %918 = vmatprep.subr.mxu0 0.0
  %919 = vmatpush1.msra.mxu0 0.0
  %920 = vmatprep.subr.mxu0 0.0
  %921 = vmatpush1.msra.mxu0 0.0
  %922 = vmatprep.subr.mxu0 0.0
  %923 = vmatpush1.msra.mxu0 0.0
  %924 = vmatprep.subr.mxu0 0.0
  %925 = vmatpush1.msra.mxu0 0.0
  %926 = vmatprep.subr.mxu0 0.0
  %927 = vmatpush1.msra.mxu0 0.0
  %928 = vmatprep.subr.mxu0 0.0
  %929 = vmatpush1.msra.mxu0 0.0
  %930 = vmatprep.subr.mxu0 0.0
  %931 = vmatpush1.msra.mxu0 0.0
  %932 = vmatprep.subr.mxu0 0.0
  %933 = vmatpush1.msra.mxu0 0.0
  %934 = vmatprep.subr.mxu0 0.0
  %935 = vmatpush1.msra.mxu0 0.0
  %936 = vmatprep.subr.mxu0 0.0
  %937 = vmatpush1.msra.mxu0 0.0
  %938 = vmatprep.subr.mxu0 0.0
  %939 = vmatpush1.msra.mxu0 0.0
  %940 = vmatprep.subr.mxu0 0.0
  %941 = vmatpush1.msra.mxu0 0.0
  %942 = vmatprep.subr.mxu0 0.0
  %943 = vmatpush1.msra.mxu0 0.0
  %944 = vmatprep.subr.mxu0 0.0
  %945 = vmatpush1.msra.mxu0 0.0
  %946 = vmatprep.subr.mxu0 0.0
  %947 = vmatpush1.msra.mxu0 0.0
  %948 = vmatprep.subr.mxu0 0.0
  %949 = vmatpush1.msra.mxu0 0.0
  %950 = vmatprep.subr.mxu0 0.0
  %951 = vmatpush1.msra.mxu0 0.0
  %952 = vmatprep.subr.mxu0 0.0
  %953 = vmatpush1.msra.mxu0 0.0
  %954 = vmatprep.subr.mxu0 0.0
  %955 = vmatpush1.msra.mxu0 0.0
  %956 = vmatprep.subr.mxu0 0.0
  %957 = vmatpush1.msra.mxu0 0.0
  %958 = vmatprep.subr.mxu0 0.0
  %959 = vmatpush1.msra.mxu0 0.0
  %960 = vmatprep.subr.mxu0 0.0
  %961 = vmatpush1.msra.mxu0 0.0
  %962 = vmatprep.subr.mxu0 0.0
  %963 = vmatpush1.msra.mxu0 0.0
  %964 = vmatprep.mubr.f32.mxu0 0.0
  %965 = vmatmul.mubr.f32.gmra.mrb[0].mxu0 %v895
  %v966 = vpop.f32.mrb[0].mxu0
  %v967 = vadd.f32 0.0, %v966
  %v968 = vpop.f32.mrb[0].mxu0
  %969 = vdwg.mxu0
  %vm970 = vcmask 15360
  %v972 = vsel %vm970, %v892, 0
  %v975 = vsel %vm435, %v148, 0
  %977 = vmatprep.subr.mxu0 0.0
  %978 = vmatpush1.msra.mxu0 %v975
  %979 = vmatprep.subr.mxu0 0.0
  %980 = vmatpush1.msra.mxu0 0.0
  %981 = vmatprep.subr.mxu0 0.0
  %982 = vmatpush1.msra.mxu0 0.0
  %983 = vmatprep.subr.mxu0 0.0
  %984 = vmatpush1.msra.mxu0 0.0
  %985 = vmatprep.subr.mxu0 0.0
  %986 = vmatpush1.msra.mxu0 0.0
  %987 = vmatprep.subr.mxu0 0.0
  %988 = vmatpush1.msra.mxu0 0.0
  %989 = vmatprep.subr.mxu0 0.0
  %990 = vmatpush1.msra.mxu0 0.0
  %991 = vmatprep.subr.mxu0 0.0
  %992 = vmatpush1.msra.mxu0 0.0
  %993 = vmatprep.subr.mxu0 0.0
  %994 = vmatpush1.msra.mxu0 0.0
  %995 = vmatprep.subr.mxu0 0.0
  %996 = vmatpush1.msra.mxu0 0.0
  %997 = vmatprep.subr.mxu0 0.0
  %998 = vmatpush1.msra.mxu0 0.0
  %999 = vmatprep.subr.mxu0 0.0
  %1000 = vmatpush1.msra.mxu0 0.0
  %1001 = vmatprep.subr.mxu0 0.0
  %1002 = vmatpush1.msra.mxu0 0.0
  %1003 = vmatprep.subr.mxu0 0.0
  %1004 = vmatpush1.msra.mxu0 0.0
  %1005 = vmatprep.subr.mxu0 0.0
  %1006 = vmatpush1.msra.mxu0 0.0
  %1007 = vmatprep.subr.mxu0 0.0
  %1008 = vmatpush1.msra.mxu0 0.0
  %1009 = vmatprep.subr.mxu0 0.0
  %1010 = vmatpush1.msra.mxu0 0.0
  %1011 = vmatprep.subr.mxu0 0.0
  %1012 = vmatpush1.msra.mxu0 0.0
  %1013 = vmatprep.subr.mxu0 0.0
  %1014 = vmatpush1.msra.mxu0 0.0
  %1015 = vmatprep.subr.mxu0 0.0
  %1016 = vmatpush1.msra.mxu0 0.0
  %1017 = vmatprep.subr.mxu0 0.0
  %1018 = vmatpush1.msra.mxu0 0.0
  %1019 = vmatprep.subr.mxu0 0.0
  %1020 = vmatpush1.msra.mxu0 0.0
  %1021 = vmatprep.subr.mxu0 0.0
  %1022 = vmatpush1.msra.mxu0 0.0
  %1023 = vmatprep.subr.mxu0 0.0
  %1024 = vmatpush1.msra.mxu0 0.0
  %1025 = vmatprep.subr.mxu0 0.0
  %1026 = vmatpush1.msra.mxu0 0.0
  %1027 = vmatprep.subr.mxu0 0.0
  %1028 = vmatpush1.msra.mxu0 0.0
  %1029 = vmatprep.subr.mxu0 0.0
  %1030 = vmatpush1.msra.mxu0 0.0
  %1031 = vmatprep.subr.mxu0 0.0
  %1032 = vmatpush1.msra.mxu0 0.0
  %1033 = vmatprep.subr.mxu0 0.0
  %1034 = vmatpush1.msra.mxu0 0.0
  %1035 = vmatprep.subr.mxu0 0.0
  %1036 = vmatpush1.msra.mxu0 0.0
  %1037 = vmatprep.subr.mxu0 0.0
  %1038 = vmatpush1.msra.mxu0 0.0
  %1039 = vmatprep.subr.mxu0 0.0
  %1040 = vmatpush1.msra.mxu0 0.0
  %1041 = vmatprep.mubr.f32.mxu0 0.0
  %1042 = vmatmul.mubr.f32.gmra.mrb[0].mxu0 %v972
  %v1043 = vpop.f32.mrb[0].mxu0
  %v1044 = vadd.f32 %v967, %v1043
  %v1045 = vpop.f32.mrb[0].mxu0
  %1046 = vdwg.mxu0
  %v1047 = vld [vmem:[%s17] sm:$0xff]
  %v1048 = vld [vmem:[%s17 + $0x8] sm:$0xff]
  %v1049 = vld [vmem:[%s17 + $0x10] sm:$0xff]
  %v1050 = vld [vmem:[%s17 + $0x18] sm:$0xff]
  %v1051 = vld [vmem:[%s18] sm:$0x1]
  %v1053 = vlaneseq
  %v1054 = vshrl.u32 %v1053, 7
  %v1055 = vsub.s32 0, %v1054
  %v1056 = vrot.slane %v1051, %v1055
  %v1059 = vsel %vm165, %v1044, 0
  %1061 = vmatprep.subr.mxu0 0.0
  %1062 = vmatpush1.msra.mxu0 %v1047
  %1063 = vmatprep.subr.mxu0 0.0
  %1064 = vmatpush1.msra.mxu0 %v1048
  %1065 = vmatprep.subr.mxu0 0.0
  %1066 = vmatpush1.msra.mxu0 %v1049
  %1067 = vmatprep.subr.mxu0 0.0
  %1068 = vmatpush1.msra.mxu0 %v1050
  %1069 = vmatprep.subr.mxu0 0.0
  %1070 = vmatpush1.msra.mxu0 0.0
  %1071 = vmatprep.subr.mxu0 0.0
  %1072 = vmatpush1.msra.mxu0 0.0
  %1073 = vmatprep.subr.mxu0 0.0
  %1074 = vmatpush1.msra.mxu0 0.0
  %1075 = vmatprep.subr.mxu0 0.0
  %1076 = vmatpush1.msra.mxu0 0.0
  %1077 = vmatprep.subr.mxu0 0.0
  %1078 = vmatpush1.msra.mxu0 0.0
  %1079 = vmatprep.subr.mxu0 0.0
  %1080 = vmatpush1.msra.mxu0 0.0
  %1081 = vmatprep.subr.mxu0 0.0
  %1082 = vmatpush1.msra.mxu0 0.0
  %1083 = vmatprep.subr.mxu0 0.0
  %1084 = vmatpush1.msra.mxu0 0.0
  %1085 = vmatprep.subr.mxu0 0.0
  %1086 = vmatpush1.msra.mxu0 0.0
  %1087 = vmatprep.subr.mxu0 0.0
  %1088 = vmatpush1.msra.mxu0 0.0
  %1089 = vmatprep.subr.mxu0 0.0
  %1090 = vmatpush1.msra.mxu0 0.0
  %1091 = vmatprep.subr.mxu0 0.0
  %1092 = vmatpush1.msra.mxu0 0.0
  %1093 = vmatprep.subr.mxu0 0.0
  %1094 = vmatpush1.msra.mxu0 0.0
  %1095 = vmatprep.subr.mxu0 0.0
  %1096 = vmatpush1.msra.mxu0 0.0
  %1097 = vmatprep.subr.mxu0 0.0
  %1098 = vmatpush1.msra.mxu0 0.0
  %1099 = vmatprep.subr.mxu0 0.0
  %1100 = vmatpush1.msra.mxu0 0.0
  %1101 = vmatprep.subr.mxu0 0.0
  %1102 = vmatpush1.msra.mxu0 0.0
  %1103 = vmatprep.subr.mxu0 0.0
  %1104 = vmatpush1.msra.mxu0 0.0
  %1105 = vmatprep.subr.mxu0 0.0
  %1106 = vmatpush1.msra.mxu0 0.0
  %1107 = vmatprep.subr.mxu0 0.0
  %1108 = vmatpush1.msra.mxu0 0.0
  %1109 = vmatprep.subr.mxu0 0.0
  %1110 = vmatpush1.msra.mxu0 0.0
  %1111 = vmatprep.subr.mxu0 0.0
  %1112 = vmatpush1.msra.mxu0 0.0
  %1113 = vmatprep.subr.mxu0 0.0
  %1114 = vmatpush1.msra.mxu0 0.0
  %1115 = vmatprep.subr.mxu0 0.0
  %1116 = vmatpush1.msra.mxu0 0.0
  %1117 = vmatprep.subr.mxu0 0.0
  %1118 = vmatpush1.msra.mxu0 0.0
  %1119 = vmatprep.subr.mxu0 0.0
  %1120 = vmatpush1.msra.mxu0 0.0
  %1121 = vmatprep.subr.mxu0 0.0
  %1122 = vmatpush1.msra.mxu0 0.0
  %1123 = vmatprep.subr.mxu0 0.0
  %1124 = vmatpush1.msra.mxu0 0.0
  %1125 = vmatprep.mubr.f32.mxu0 0.0
  %1126 = vmatmul.mubr.f32.gmra.mrb[0].mxu0 %v1059
  %v1127 = vpop.f32.mrb[0].mxu0
  %v1128 = vadd.f32 %v1056, %v1127
  %v1129 = vpop.f32.mrb[0].mxu0
  %1130 = vdwg.mxu0
  %v1131 = vmax.f32 %v1128, 0.0
  %v1132 = vld [vmem:[%s19] sm:$0xff]
  %v1133 = vld [vmem:[%s19 + $0x8] sm:$0xff]
  %v1134 = vld [vmem:[%s19 + $0x10] sm:$0xff]
  %v1135 = vld [vmem:[%s19 + $0x18] sm:$0xff]
  %v1136 = vld [vmem:[%s20] sm:$0x1]
  %v1138 = vlaneseq
  %v1139 = vshrl.u32 %v1138, 7
  %v1140 = vsub.s32 0, %v1139
  %v1141 = vrot.slane %v1136, %v1140
  %v1144 = vsel %vm165, %v1131, 0
  %1146 = vmatprep.subr.mxu0 0.0
  %1147 = vmatpush1.msra.mxu0 %v1132
  %1148 = vmatprep.subr.mxu0 0.0
  %1149 = vmatpush1.msra.mxu0 %v1133
  %1150 = vmatprep.subr.mxu0 0.0
  %1151 = vmatpush1.msra.mxu0 %v1134
  %1152 = vmatprep.subr.mxu0 0.0
  %1153 = vmatpush1.msra.mxu0 %v1135
  %1154 = vmatprep.subr.mxu0 0.0
  %1155 = vmatpush1.msra.mxu0 0.0
  %1156 = vmatprep.subr.mxu0 0.0
  %1157 = vmatpush1.msra.mxu0 0.0
  %1158 = vmatprep.subr.mxu0 0.0
  %1159 = vmatpush1.msra.mxu0 0.0
  %1160 = vmatprep.subr.mxu0 0.0
  %1161 = vmatpush1.msra.mxu0 0.0
  %1162 = vmatprep.subr.mxu0 0.0
  %1163 = vmatpush1.msra.mxu0 0.0
  %1164 = vmatprep.subr.mxu0 0.0
  %1165 = vmatpush1.msra.mxu0 0.0
  %1166 = vmatprep.subr.mxu0 0.0
  %1167 = vmatpush1.msra.mxu0 0.0
  %1168 = vmatprep.subr.mxu0 0.0
  %1169 = vmatpush1.msra.mxu0 0.0
  %1170 = vmatprep.subr.mxu0 0.0
  %1171 = vmatpush1.msra.mxu0 0.0
  %1172 = vmatprep.subr.mxu0 0.0
  %1173 = vmatpush1.msra.mxu0 0.0
  %1174 = vmatprep.subr.mxu0 0.0
  %1175 = vmatpush1.msra.mxu0 0.0
  %1176 = vmatprep.subr.mxu0 0.0
  %1177 = vmatpush1.msra.mxu0 0.0
  %1178 = vmatprep.subr.mxu0 0.0
  %1179 = vmatpush1.msra.mxu0 0.0
  %1180 = vmatprep.subr.mxu0 0.0
  %1181 = vmatpush1.msra.mxu0 0.0
  %1182 = vmatprep.subr.mxu0 0.0
  %1183 = vmatpush1.msra.mxu0 0.0
  %1184 = vmatprep.subr.mxu0 0.0
  %1185 = vmatpush1.msra.mxu0 0.0
  %1186 = vmatprep.subr.mxu0 0.0
  %1187 = vmatpush1.msra.mxu0 0.0
  %1188 = vmatprep.subr.mxu0 0.0
  %1189 = vmatpush1.msra.mxu0 0.0
  %1190 = vmatprep.subr.mxu0 0.0
  %1191 = vmatpush1.msra.mxu0 0.0
  %1192 = vmatprep.subr.mxu0 0.0
  %1193 = vmatpush1.msra.mxu0 0.0
  %1194 = vmatprep.subr.mxu0 0.0
  %1195 = vmatpush1.msra.mxu0 0.0
  %1196 = vmatprep.subr.mxu0 0.0
  %1197 = vmatpush1.msra.mxu0 0.0
  %1198 = vmatprep.subr.mxu0 0.0
  %1199 = vmatpush1.msra.mxu0 0.0
  %1200 = vmatprep.subr.mxu0 0.0
  %1201 = vmatpush1.msra.mxu0 0.0
  %1202 = vmatprep.subr.mxu0 0.0
  %1203 = vmatpush1.msra.mxu0 0.0
  %1204 = vmatprep.subr.mxu0 0.0
  %1205 = vmatpush1.msra.mxu0 0.0
  %1206 = vmatprep.subr.mxu0 0.0
  %1207 = vmatpush1.msra.mxu0 0.0
  %1208 = vmatprep.subr.mxu0 0.0
  %1209 = vmatpush1.msra.mxu0 0.0
  %1210 = vmatprep.mubr.f32.mxu0 0.0
  %1211 = vmatmul.mubr.f32.gmra.mrb[0].mxu0 %v1144
  %v1212 = vpop.f32.mrb[0].mxu0
  %v1213 = vadd.f32 %v1141, %v1212
  %v1214 = vpop.f32.mrb[0].mxu0
  %1215 = vdwg.mxu0
  %1216 = vst [vmem:[%s21] sm:$0xf] %v1213
  // Predicated region
  $region86: #{multimodal_simclr_forward.1} parent=0 // pred_check
    _
  $region87: #{multimodal_simclr_forward.1} parent=0 // pred_check_branch
    %1218 = sbr.rel (0) target = $region89
  $region88: #{multimodal_simclr_forward.1} parent=0 // pred_region
    _
  $region89: #{multimodal_simclr_forward.1} parent=0 // pred_fallthru
    _
  // Predicated region
  $region90: #{multimodal_simclr_forward.1} parent=0 // pred_check
    _
  $region91: #{multimodal_simclr_forward.1} parent=0 // pred_check_branch
    %1220 = sbr.rel (0) target = $region93
  $region92: #{multimodal_simclr_forward.1} parent=0 // pred_region
    _
  $region93: #{multimodal_simclr_forward.1} parent=0 // pred_fallthru
    _

</llo_original>
